<compile_context>
chip_gen: v7x
topology: tpu7x:2x2x1
jax: 0.10.0
libtpu: 0.0.40
codegen_flags: <defaults>
</compile_context>

<pallas_src>
import functools

import jax
import jax.numpy as jnp
from jax import lax
from jax.experimental import pallas as pl
from jax.experimental.pallas import tpu as pltpu


# ---------------------------------------------------------------------------
# in-kernel helpers
# ---------------------------------------------------------------------------
def _im2col_into_slab(x_chw, mask_ref, slab_ref, col0, *, W, C, HW, mm_dtype):
    """Scatter the 9 shifted 3x3 taps of one lane-dense (C, H*W) image into the
    (9*C, Nb*H*W) im2col slab scratch, columns [col0, col0 + HW).

    Tap (dh, dw) of output pixel p reads input pixel p + (dh-1)*W + (dw-1);
    it is produced with a lane roll of the already lane-dense image plus a
    precomputed border-validity mask, so there is no padded buffer and no
    relayouting reshape/concatenate.
    """
    for k in range(9):
        dh, dw = divmod(k, 3)
        off = (dh - 1) * W + (dw - 1)
        if k == 4:                                  # centre tap: no shift, all valid
            tap = x_chw
        else:
            tap = pltpu.roll(x_chw, (-off) % HW, 1) * mask_ref[k:k + 1, :]
        slab_ref[k * C:(k + 1) * C, col0:col0 + HW] = tap.astype(mm_dtype)


def _conv_from_slab(w_ref, b_ref, slab_ref):
    """Single MXU matmul (C, 9C) @ (9C, Nb*HW), f32 accumulation, + bias."""
    return jnp.dot(w_ref[...], slab_ref[...],
                   preferred_element_type=jnp.float32) + b_ref[...]


# ---------------------------------------------------------------------------
# pass 1: conv1 + bias
# ---------------------------------------------------------------------------
def _conv1_kernel(x_ref, w_ref, b_ref, mask_ref, y_ref, slab_ref, *, W, C, mm_dtype):
    nb, _, HW = x_ref.shape
    for n in range(nb):
        _im2col_into_slab(x_ref[n], mask_ref, slab_ref, n * HW,
                          W=W, C=C, HW=HW, mm_dtype=mm_dtype)
    y = _conv_from_slab(w_ref, b_ref, slab_ref)           # (C, nb*HW) f32
    for n in range(nb):
        y_ref[n] = y[:, n * HW:(n + 1) * HW]               # lane-dense stores


# ---------------------------------------------------------------------------
# pass 2: BN1 affine + PReLU + conv2 + bias
# ---------------------------------------------------------------------------
def _stage2_kernel(y1_ref, sc_ref, sh_ref, w_ref, b_ref, mask_ref, alpha_ref,
                   y2_ref, slab_ref, *, W, C, mm_dtype):
    nb, _, HW = y1_ref.shape
    a = alpha_ref[0, 0]                                     # PReLU slope (SMEM)
    for n in range(nb):
        z = y1_ref[n] * sc_ref[...] + sh_ref[...]           # BN1 folded to affine
        z = jnp.where(z >= 0, z, a * z)                     # PReLU
        _im2col_into_slab(z, mask_ref, slab_ref, n * HW,
                          W=W, C=C, HW=HW, mm_dtype=mm_dtype)
    y = _conv_from_slab(w_ref, b_ref, slab_ref)
    for n in range(nb):
        y2_ref[n] = y[:, n * HW:(n + 1) * HW]


# ---------------------------------------------------------------------------
# pass 3: BN2 affine + residual + PReLU (pure elementwise, lane-dense)
# ---------------------------------------------------------------------------
def _stage3_kernel(y2_ref, x_ref, sc_ref, sh_ref, alpha_ref, o_ref):
    a = alpha_ref[0, 0]
    v = y2_ref[...] * sc_ref[...] + sh_ref[...] + x_ref[...]
    o_ref[...] = jnp.where(v >= 0, v, a * v)


# ---------------------------------------------------------------------------
# wrapper: NCHW in / NCHW out (PyTorch convention), no transposes anywhere
# ---------------------------------------------------------------------------
def resnet_block_forward(x_nchw, params, eps=1e-5, use_bf16_matmul=False):
    f32 = jnp.float32
    N, C, H, W = x_nchw.shape
    HW = H * W
    x = x_nchw.reshape(N, C, HW).astype(f32)        # channel-major, lane-dense

    mm_dtype = jnp.bfloat16 if use_bf16_matmul else f32

    # conv weights as (C, 9C) matrices: column index k*C + cin, with k = 3*dh + dw
    def to_mat(w_oihw):
        return jnp.transpose(w_oihw, (0, 2, 3, 1)).reshape(C, 9 * C).astype(mm_dtype)

    w1m, w2m = to_mat(params["w1"]), to_mat(params["w2"])
    b1 = params["b1"].reshape(C, 1).astype(f32)
    b2 = params["b2"].reshape(C, 1).astype(f32)
    gamma = params["gamma"].astype(f32)
    beta = params["beta"].astype(f32)
    alpha = params["alpha"].reshape(1, 1).astype(f32)

    # per-tap border-validity masks over the flattened pixel axis: (9, HW)
    hh = jnp.arange(H).reshape(H, 1)
    ww = jnp.arange(W).reshape(1, W)
    rows = []
    for dh in range(3):
        for dw in range(3):
            ok = ((hh + dh - 1 >= 0) & (hh + dh - 1 < H) &
                  (ww + dw - 1 >= 0) & (ww + dw - 1 < W))
            rows.append(ok.reshape(1, HW))
    mask9 = jnp.concatenate(rows, axis=0).astype(f32)

    # images per grid step: big enough to amortize per-step pipeline overhead,
    # small enough to keep >=2 grid steps (megacore / per-core pipelining on
    # v7x) and a modest VMEM footprint.
    per_image_bytes = 4 * C * HW * (2 + 9)          # in/out blocks + slab rows
    nb = N
    while nb > 1 and (N % nb != 0 or N // nb < 2
                      or nb * per_image_bytes > (2 << 20)):
        nb -= 1
    grid = (N // nb,)

    try:
        vmem_cap = int(pltpu.get_tpu_info().vmem_capacity_bytes)
    except Exception:                               # conservative fallback
        vmem_cap = 64 * 1024 * 1024
    cparams = pltpu.CompilerParams(
        dimension_semantics=("parallel",),          # megacore sharding on v7x
        vmem_limit_bytes=max(32 << 20, min(vmem_cap * 3 // 4, 100 << 20)))

    smem_spec = pl.BlockSpec(memory_space=pltpu.MemorySpace.SMEM)
    act_spec = pl.BlockSpec((nb, C, HW), lambda i: (i, 0, 0))
    w_spec = pl.BlockSpec((C, 9 * C), lambda i: (0, 0))
    cvec_spec = pl.BlockSpec((C, 1), lambda i: (0, 0))
    mask_spec = pl.BlockSpec((9, HW), lambda i: (0, 0))
    slab_scratch = [pltpu.VMEM((9 * C, nb * HW), mm_dtype)]

    # -------- pass 1: conv1 + bias --------
    y1 = pl.pallas_call(
        functools.partial(_conv1_kernel, W=W, C=C, mm_dtype=mm_dtype),
        out_shape=jax.ShapeDtypeStruct((N, C, HW), f32),
        grid_spec=pltpu.PrefetchScalarGridSpec(
            num_scalar_prefetch=0, grid=grid,
            in_specs=[act_spec, w_spec, cvec_spec, mask_spec],
            out_specs=act_spec,
            scratch_shapes=slab_scratch),
        compiler_params=cparams,
    )(x, w1m, b1, mask9)

    # exact train-mode BatchNorm folded to a per-channel affine (O(C) XLA glue)
    def bn_affine(y):
        mean = jnp.mean(y, axis=(0, 2))
        var = jnp.mean(jnp.square(y - mean.reshape(1, C, 1)), axis=(0, 2))
        scale = gamma * lax.rsqrt(var + eps)
        return scale.reshape(C, 1), (beta - mean * scale).reshape(C, 1)

    scale1, shift1 = bn_affine(y1)

    # -------- pass 2: BN1 affine + PReLU + conv2 + bias --------
    y2 = pl.pallas_call(
        functools.partial(_stage2_kernel, W=W, C=C, mm_dtype=mm_dtype),
        out_shape=jax.ShapeDtypeStruct((N, C, HW), f32),
        grid_spec=pltpu.PrefetchScalarGridSpec(
            num_scalar_prefetch=0, grid=grid,
            in_specs=[act_spec, cvec_spec, cvec_spec, w_spec, cvec_spec,
                      mask_spec, smem_spec],
            out_specs=act_spec,
            scratch_shapes=slab_scratch),
        compiler_params=cparams,
    )(y1, scale1, shift1, w2m, b2, mask9, alpha)

    scale2, shift2 = bn_affine(y2)

    # -------- pass 3: BN2 affine + residual + PReLU --------
    out = pl.pallas_call(
        _stage3_kernel,
        out_shape=jax.ShapeDtypeStruct((N, C, HW), f32),
        grid_spec=pltpu.PrefetchScalarGridSpec(
            num_scalar_prefetch=0, grid=grid,
            in_specs=[act_spec, act_spec, cvec_spec, cvec_spec, smem_spec],
            out_specs=act_spec),
        compiler_params=cparams,
    )(y2, x, scale2, shift2, alpha)

    return out.reshape(N, C, H, W)


# ---------------- pure-JAX reference (for correctness check) ----------------
def _reference_forward(x, params, eps=1e-5):
    C = x.shape[1]

    def conv(y, w, b):
        out = lax.conv_general_dilated(
            y, w, window_strides=(1, 1), padding="SAME",
            dimension_numbers=("NCHW", "OIHW", "NCHW"))
        return out + b.reshape(1, C, 1, 1)

    def bn(y):
        mean = jnp.mean(y, axis=(0, 2, 3), keepdims=True)
        var = jnp.mean((y - mean) ** 2, axis=(0, 2, 3), keepdims=True)
        return ((y - mean) * lax.rsqrt(var + eps)
                * params["gamma"].reshape(1, C, 1, 1)
                + params["beta"].reshape(1, C, 1, 1))

    def prelu(y):
        a = params["alpha"][0]
        return jnp.where(y >= 0, y, a * y)

    out = prelu(bn(conv(x, params["w1"], params["b1"])))
    out = bn(conv(out, params["w2"], params["b2"]))
    out = prelu(out + x)
    return out


if __name__ == "__main__":
    N, C, H, W = 2, 4, 16, 16          # num_filter = 4
    key = jax.random.PRNGKey(0)
    k = jax.random.split(key, 8)

    x = jax.random.normal(k[0], (N, C, H, W), jnp.float32)
    params = {
        "w1": 0.2 * jax.random.normal(k[1], (C, C, 3, 3), jnp.float32),
        "b1": 0.1 * jax.random.normal(k[2], (C,), jnp.float32),
        "w2": 0.2 * jax.random.normal(k[3], (C, C, 3, 3), jnp.float32),
        "b2": 0.1 * jax.random.normal(k[4], (C,), jnp.float32),
        "gamma": 1.0 + 0.1 * jax.random.normal(k[5], (C,), jnp.float32),
        "beta": 0.1 * jax.random.normal(k[6], (C,), jnp.float32),
        "alpha": jnp.full((1,), 0.25, jnp.float32),   # torch.nn.PReLU() default
    }

    out = jax.block_until_ready(jax.jit(resnet_block_forward)(x, params))
    ref = jax.block_until_ready(_reference_forward(x, params))

    assert out.shape == (N, C, H, W), out.shape
    if not jnp.allclose(out, ref, atol=2e-4, rtol=2e-4):
        max_err = float(jnp.max(jnp.abs(out - ref)))
        raise AssertionError(f"mismatch vs reference, max abs err = {max_err}")

    print("KERNEL_OK")
</pallas_src>

<mosaic_0001>
module attributes {stable_mosaic.version = 11 : i64} {
  func.func @_conv1_kernel(%arg0: i32, %arg1: memref<1x4x256xf32, #tpu.memory_space<vmem>>, %arg2: memref<4x36xf32, #tpu.memory_space<vmem>>, %arg3: memref<4x1xf32, #tpu.memory_space<vmem>>, %arg4: memref<9x256xf32, #tpu.memory_space<vmem>>, %arg5: memref<1x4x256xf32, #tpu.memory_space<vmem>>, %arg6: memref<36x256xf32, #tpu.memory_space<vmem>>) attributes {dimension_semantics = [#tpu.dimension_semantics<parallel>], iteration_bounds = array<i64: 2>, scalar_prefetch = 0 : i64, scratch_operands = 1 : i64, tpu.core_type = #tpu.core_type<tc>, window_params = [{transform_indices = @transform_0, window_bounds = array<i64: 1, 4, 256>}, {pipeline_mode = #tpu.pipeline_mode<synchronous>, transform_indices = @transform_1, window_bounds = array<i64: 4, 36>}, {pipeline_mode = #tpu.pipeline_mode<synchronous>, transform_indices = @transform_2, window_bounds = array<i64: 4, 1>}, {pipeline_mode = #tpu.pipeline_mode<synchronous>, transform_indices = @transform_3, window_bounds = array<i64: 9, 256>}, {transform_indices = @transform_4, window_bounds = array<i64: 1, 4, 256>}]} {
    %c0 = arith.constant 0 : index
    %c0_0 = arith.constant 0 : index
    %c0_1 = arith.constant 0 : index
    %0 = vector.load %arg1[%c0, %c0_0, %c0_1] : memref<1x4x256xf32, #tpu.memory_space<vmem>>, vector<1x4x256xf32>
    %1 = vector.shape_cast %0 : vector<1x4x256xf32> to vector<4x256xf32>
    %c17_i32 = arith.constant 17 : i32
    %2 = tpu.dynamic_rotate %1 by %c17_i32 dim 1 : vector<4x256xf32>, i32 -> vector<4x256xf32>
    %c0_2 = arith.constant 0 : index
    %c0_3 = arith.constant 0 : index
    %3 = vector.load %arg4[%c0_2, %c0_3] : memref<9x256xf32, #tpu.memory_space<vmem>>, vector<1x256xf32>
    %4 = vector.broadcast %3 : vector<1x256xf32> to vector<4x256xf32>
    %5 = arith.mulf %2, %4 : vector<4x256xf32>
    %c0_4 = arith.constant 0 : index
    %c0_5 = arith.constant 0 : index
    %6 = vector.load %arg6[%c0_4, %c0_5] : memref<36x256xf32, #tpu.memory_space<vmem>>, vector<4x256xf32>
    tpu.vector_store %arg6[%c0_4, %c0_5], %5 {strides = array<i32>} : memref<36x256xf32, #tpu.memory_space<vmem>>, vector<4x256xf32>,
    %c16_i32 = arith.constant 16 : i32
    %7 = tpu.dynamic_rotate %1 by %c16_i32 dim 1 : vector<4x256xf32>, i32 -> vector<4x256xf32>
    %c1 = arith.constant 1 : index
    %c0_6 = arith.constant 0 : index
    %8 = vector.load %arg4[%c1, %c0_6] : memref<9x256xf32, #tpu.memory_space<vmem>>, vector<1x256xf32>
    %9 = vector.broadcast %8 : vector<1x256xf32> to vector<4x256xf32>
    %10 = arith.mulf %7, %9 : vector<4x256xf32>
    %c4 = arith.constant 4 : index
    %c0_7 = arith.constant 0 : index
    %11 = vector.load %arg6[%c4, %c0_7] : memref<36x256xf32, #tpu.memory_space<vmem>>, vector<4x256xf32>
    tpu.vector_store %arg6[%c4, %c0_7], %10 {strides = array<i32>} : memref<36x256xf32, #tpu.memory_space<vmem>>, vector<4x256xf32>,
    %c15_i32 = arith.constant 15 : i32
    %12 = tpu.dynamic_rotate %1 by %c15_i32 dim 1 : vector<4x256xf32>, i32 -> vector<4x256xf32>
    %c2 = arith.constant 2 : index
    %c0_8 = arith.constant 0 : index
    %13 = vector.load %arg4[%c2, %c0_8] : memref<9x256xf32, #tpu.memory_space<vmem>>, vector<1x256xf32>
    %14 = vector.broadcast %13 : vector<1x256xf32> to vector<4x256xf32>
    %15 = arith.mulf %12, %14 : vector<4x256xf32>
    %c8 = arith.constant 8 : index
    %c0_9 = arith.constant 0 : index
    %16 = vector.load %arg6[%c8, %c0_9] : memref<36x256xf32, #tpu.memory_space<vmem>>, vector<4x256xf32>
    tpu.vector_store %arg6[%c8, %c0_9], %15 {strides = array<i32>} : memref<36x256xf32, #tpu.memory_space<vmem>>, vector<4x256xf32>,
    %c1_i32 = arith.constant 1 : i32
    %17 = tpu.dynamic_rotate %1 by %c1_i32 dim 1 : vector<4x256xf32>, i32 -> vector<4x256xf32>
    %c3 = arith.constant 3 : index
    %c0_10 = arith.constant 0 : index
    %18 = vector.load %arg4[%c3, %c0_10] : memref<9x256xf32, #tpu.memory_space<vmem>>, vector<1x256xf32>
    %19 = vector.broadcast %18 : vector<1x256xf32> to vector<4x256xf32>
    %20 = arith.mulf %17, %19 : vector<4x256xf32>
    %c12 = arith.constant 12 : index
    %c0_11 = arith.constant 0 : index
    %21 = vector.load %arg6[%c12, %c0_11] : memref<36x256xf32, #tpu.memory_space<vmem>>, vector<4x256xf32>
    tpu.vector_store %arg6[%c12, %c0_11], %20 {strides = array<i32>} : memref<36x256xf32, #tpu.memory_space<vmem>>, vector<4x256xf32>,
    %c16 = arith.constant 16 : index
    %c0_12 = arith.constant 0 : index
    %22 = vector.load %arg6[%c16, %c0_12] : memref<36x256xf32, #tpu.memory_space<vmem>>, vector<4x256xf32>
    tpu.vector_store %arg6[%c16, %c0_12], %1 {strides = array<i32>} : memref<36x256xf32, #tpu.memory_space<vmem>>, vector<4x256xf32>,
    %c255_i32 = arith.constant 255 : i32
    %23 = tpu.dynamic_rotate %1 by %c255_i32 dim 1 : vector<4x256xf32>, i32 -> vector<4x256xf32>
    %c5 = arith.constant 5 : index
    %c0_13 = arith.constant 0 : index
    %24 = vector.load %arg4[%c5, %c0_13] : memref<9x256xf32, #tpu.memory_space<vmem>>, vector<1x256xf32>
    %25 = vector.broadcast %24 : vector<1x256xf32> to vector<4x256xf32>
    %26 = arith.mulf %23, %25 : vector<4x256xf32>
    %c20 = arith.constant 20 : index
    %c0_14 = arith.constant 0 : index
    %27 = vector.load %arg6[%c20, %c0_14] : memref<36x256xf32, #tpu.memory_space<vmem>>, vector<4x256xf32>
    tpu.vector_store %arg6[%c20, %c0_14], %26 {strides = array<i32>} : memref<36x256xf32, #tpu.memory_space<vmem>>, vector<4x256xf32>,
    %c241_i32 = arith.constant 241 : i32
    %28 = tpu.dynamic_rotate %1 by %c241_i32 dim 1 : vector<4x256xf32>, i32 -> vector<4x256xf32>
    %c6 = arith.constant 6 : index
    %c0_15 = arith.constant 0 : index
    %29 = vector.load %arg4[%c6, %c0_15] : memref<9x256xf32, #tpu.memory_space<vmem>>, vector<1x256xf32>
    %30 = vector.broadcast %29 : vector<1x256xf32> to vector<4x256xf32>
    %31 = arith.mulf %28, %30 : vector<4x256xf32>
    %c24 = arith.constant 24 : index
    %c0_16 = arith.constant 0 : index
    %32 = vector.load %arg6[%c24, %c0_16] : memref<36x256xf32, #tpu.memory_space<vmem>>, vector<4x256xf32>
    tpu.vector_store %arg6[%c24, %c0_16], %31 {strides = array<i32>} : memref<36x256xf32, #tpu.memory_space<vmem>>, vector<4x256xf32>,
    %c240_i32 = arith.constant 240 : i32
    %33 = tpu.dynamic_rotate %1 by %c240_i32 dim 1 : vector<4x256xf32>, i32 -> vector<4x256xf32>
    %c7 = arith.constant 7 : index
    %c0_17 = arith.constant 0 : index
    %34 = vector.load %arg4[%c7, %c0_17] : memref<9x256xf32, #tpu.memory_space<vmem>>, vector<1x256xf32>
    %35 = vector.broadcast %34 : vector<1x256xf32> to vector<4x256xf32>
    %36 = arith.mulf %33, %35 : vector<4x256xf32>
    %c28 = arith.constant 28 : index
    %c0_18 = arith.constant 0 : index
    %37 = vector.load %arg6[%c28, %c0_18] : memref<36x256xf32, #tpu.memory_space<vmem>>, vector<4x256xf32>
    tpu.vector_store %arg6[%c28, %c0_18], %36 {strides = array<i32>} : memref<36x256xf32, #tpu.memory_space<vmem>>, vector<4x256xf32>,
    %c239_i32 = arith.constant 239 : i32
    %38 = tpu.dynamic_rotate %1 by %c239_i32 dim 1 : vector<4x256xf32>, i32 -> vector<4x256xf32>
    %c8_19 = arith.constant 8 : index
    %c0_20 = arith.constant 0 : index
    %39 = vector.load %arg4[%c8_19, %c0_20] : memref<9x256xf32, #tpu.memory_space<vmem>>, vector<1x256xf32>
    %40 = vector.broadcast %39 : vector<1x256xf32> to vector<4x256xf32>
    %41 = arith.mulf %38, %40 : vector<4x256xf32>
    %c32 = arith.constant 32 : index
    %c0_21 = arith.constant 0 : index
    %42 = vector.load %arg6[%c32, %c0_21] : memref<36x256xf32, #tpu.memory_space<vmem>>, vector<4x256xf32>
    tpu.vector_store %arg6[%c32, %c0_21], %41 {strides = array<i32>} : memref<36x256xf32, #tpu.memory_space<vmem>>, vector<4x256xf32>,
    %c0_22 = arith.constant 0 : index
    %c0_23 = arith.constant 0 : index
    %43 = vector.load %arg2[%c0_22, %c0_23] : memref<4x36xf32, #tpu.memory_space<vmem>>, vector<4x36xf32>
    %c0_24 = arith.constant 0 : index
    %c0_25 = arith.constant 0 : index
    %44 = vector.load %arg6[%c0_24, %c0_25] : memref<36x256xf32, #tpu.memory_space<vmem>>, vector<36x256xf32>
    %cst = arith.constant dense<0.000000e+00> : vector<4x256xf32>
    %45 = tpu.matmul %43, %44, %cst {dimension_numbers = #tpu.dot_dimension_numbers<[1], [0], [0], [1], [0, 0, 1, 1], [], []>} : vector<4x36xf32>, vector<36x256xf32>, vector<4x256xf32> -> vector<4x256xf32>
    %c0_26 = arith.constant 0 : index
    %c0_27 = arith.constant 0 : index
    %46 = vector.load %arg3[%c0_26, %c0_27] : memref<4x1xf32, #tpu.memory_space<vmem>>, vector<4x1xf32>
    %47 = vector.broadcast %46 : vector<4x1xf32> to vector<4x256xf32>
    %48 = arith.addf %45, %47 : vector<4x256xf32>
    %c0_28 = arith.constant 0 : index
    %c0_29 = arith.constant 0 : index
    %c0_30 = arith.constant 0 : index
    %49 = vector.load %arg5[%c0_28, %c0_29, %c0_30] : memref<1x4x256xf32, #tpu.memory_space<vmem>>, vector<1x4x256xf32>
    %50 = vector.shape_cast %49 : vector<1x4x256xf32> to vector<4x256xf32>
    %51 = vector.shape_cast %48 : vector<4x256xf32> to vector<1x4x256xf32>
    tpu.vector_store %arg5[%c0_28, %c0_29, %c0_30], %51 {strides = array<i32>} : memref<1x4x256xf32, #tpu.memory_space<vmem>>, vector<1x4x256xf32>,
    return
  }
  func.func @transform_0(%arg0: i32) -> (i32, i32, i32) {
    %c0_i32 = arith.constant 0 : i32
    %c0_i32_0 = arith.constant 0 : i32
    %c0_i32_1 = arith.constant 0 : i32
    return %arg0, %c0_i32, %c0_i32_0 : i32, i32, i32
  }
  func.func @transform_1(%arg0: i32) -> (i32, i32) {
    %c0_i32 = arith.constant 0 : i32
    %c0_i32_0 = arith.constant 0 : i32
    %c0_i32_1 = arith.constant 0 : i32
    return %c0_i32, %c0_i32_0 : i32, i32
  }
  func.func @transform_2(%arg0: i32) -> (i32, i32) {
    %c0_i32 = arith.constant 0 : i32
    %c0_i32_0 = arith.constant 0 : i32
    %c0_i32_1 = arith.constant 0 : i32
    return %c0_i32, %c0_i32_0 : i32, i32
  }
  func.func @transform_3(%arg0: i32) -> (i32, i32) {
    %c0_i32 = arith.constant 0 : i32
    %c0_i32_0 = arith.constant 0 : i32
    %c0_i32_1 = arith.constant 0 : i32
    return %c0_i32, %c0_i32_0 : i32, i32
  }
  func.func @transform_4(%arg0: i32) -> (i32, i32, i32) {
    %c0_i32 = arith.constant 0 : i32
    %c0_i32_0 = arith.constant 0 : i32
    %c0_i32_1 = arith.constant 0 : i32
    return %arg0, %c0_i32, %c0_i32_0 : i32, i32, i32
  }
}

module attributes {stable_mosaic.version = 11 : i64} {
  func.func @_stage2_kernel(%arg0: i32, %arg1: memref<1x4x256xf32, #tpu.memory_space<vmem>>, %arg2: memref<4x1xf32, #tpu.memory_space<vmem>>, %arg3: memref<4x1xf32, #tpu.memory_space<vmem>>, %arg4: memref<4x36xf32, #tpu.memory_space<vmem>>, %arg5: memref<4x1xf32, #tpu.memory_space<vmem>>, %arg6: memref<9x256xf32, #tpu.memory_space<vmem>>, %arg7: memref<1x1xf32, #tpu.memory_space<smem>>, %arg8: memref<1x4x256xf32, #tpu.memory_space<vmem>>, %arg9: memref<36x256xf32, #tpu.memory_space<vmem>>) attributes {dimension_semantics = [#tpu.dimension_semantics<parallel>], iteration_bounds = array<i64: 2>, scalar_prefetch = 0 : i64, scratch_operands = 1 : i64, tpu.core_type = #tpu.core_type<tc>, window_params = [{transform_indices = @transform_0, window_bounds = array<i64: 1, 4, 256>}, {pipeline_mode = #tpu.pipeline_mode<synchronous>, transform_indices = @transform_1, window_bounds = array<i64: 4, 1>}, {pipeline_mode = #tpu.pipeline_mode<synchronous>, transform_indices = @transform_2, window_bounds = array<i64: 4, 1>}, {pipeline_mode = #tpu.pipeline_mode<synchronous>, transform_indices = @transform_3, window_bounds = array<i64: 4, 36>}, {pipeline_mode = #tpu.pipeline_mode<synchronous>, transform_indices = @transform_4, window_bounds = array<i64: 4, 1>}, {pipeline_mode = #tpu.pipeline_mode<synchronous>, transform_indices = @transform_5, window_bounds = array<i64: 9, 256>}, {transform_indices = @transform_6, window_bounds = array<i64: 1, 1>}, {transform_indices = @transform_7, window_bounds = array<i64: 1, 4, 256>}]} {
    %c0 = arith.constant 0 : index
    %c0_0 = arith.constant 0 : index
    %0 = memref.load %arg7[%c0, %c0_0] : memref<1x1xf32, #tpu.memory_space<smem>>
    %c0_1 = arith.constant 0 : index
    %c0_2 = arith.constant 0 : index
    %c0_3 = arith.constant 0 : index
    %1 = vector.load %arg1[%c0_1, %c0_2, %c0_3] : memref<1x4x256xf32, #tpu.memory_space<vmem>>, vector<1x4x256xf32>
    %2 = vector.shape_cast %1 : vector<1x4x256xf32> to vector<4x256xf32>
    %c0_4 = arith.constant 0 : index
    %c0_5 = arith.constant 0 : index
    %3 = vector.load %arg2[%c0_4, %c0_5] : memref<4x1xf32, #tpu.memory_space<vmem>>, vector<4x1xf32>
    %4 = vector.broadcast %3 : vector<4x1xf32> to vector<4x256xf32>
    %5 = arith.mulf %2, %4 : vector<4x256xf32>
    %c0_6 = arith.constant 0 : index
    %c0_7 = arith.constant 0 : index
    %6 = vector.load %arg3[%c0_6, %c0_7] : memref<4x1xf32, #tpu.memory_space<vmem>>, vector<4x1xf32>
    %7 = vector.broadcast %6 : vector<4x1xf32> to vector<4x256xf32>
    %8 = arith.addf %5, %7 : vector<4x256xf32>
    %cst = arith.constant 0.000000e+00 : f32
    %9 = vector.broadcast %cst : f32 to vector<4x256xf32>
    %10 = arith.cmpf oge, %8, %9 : vector<4x256xf32>
    %11 = vector.broadcast %0 : f32 to vector<4x256xf32>
    %12 = arith.mulf %11, %8 : vector<4x256xf32>
    %13 = arith.select %10, %8, %12 : vector<4x256xi1>, vector<4x256xf32>
    %c17_i32 = arith.constant 17 : i32
    %14 = tpu.dynamic_rotate %13 by %c17_i32 dim 1 : vector<4x256xf32>, i32 -> vector<4x256xf32>
    %c0_8 = arith.constant 0 : index
    %c0_9 = arith.constant 0 : index
    %15 = vector.load %arg6[%c0_8, %c0_9] : memref<9x256xf32, #tpu.memory_space<vmem>>, vector<1x256xf32>
    %16 = vector.broadcast %15 : vector<1x256xf32> to vector<4x256xf32>
    %17 = arith.mulf %14, %16 : vector<4x256xf32>
    %c0_10 = arith.constant 0 : index
    %c0_11 = arith.constant 0 : index
    %18 = vector.load %arg9[%c0_10, %c0_11] : memref<36x256xf32, #tpu.memory_space<vmem>>, vector<4x256xf32>
    tpu.vector_store %arg9[%c0_10, %c0_11], %17 {strides = array<i32>} : memref<36x256xf32, #tpu.memory_space<vmem>>, vector<4x256xf32>,
    %c16_i32 = arith.constant 16 : i32
    %19 = tpu.dynamic_rotate %13 by %c16_i32 dim 1 : vector<4x256xf32>, i32 -> vector<4x256xf32>
    %c1 = arith.constant 1 : index
    %c0_12 = arith.constant 0 : index
    %20 = vector.load %arg6[%c1, %c0_12] : memref<9x256xf32, #tpu.memory_space<vmem>>, vector<1x256xf32>
    %21 = vector.broadcast %20 : vector<1x256xf32> to vector<4x256xf32>
    %22 = arith.mulf %19, %21 : vector<4x256xf32>
    %c4 = arith.constant 4 : index
    %c0_13 = arith.constant 0 : index
    %23 = vector.load %arg9[%c4, %c0_13] : memref<36x256xf32, #tpu.memory_space<vmem>>, vector<4x256xf32>
    tpu.vector_store %arg9[%c4, %c0_13], %22 {strides = array<i32>} : memref<36x256xf32, #tpu.memory_space<vmem>>, vector<4x256xf32>,
    %c15_i32 = arith.constant 15 : i32
    %24 = tpu.dynamic_rotate %13 by %c15_i32 dim 1 : vector<4x256xf32>, i32 -> vector<4x256xf32>
    %c2 = arith.constant 2 : index
    %c0_14 = arith.constant 0 : index
    %25 = vector.load %arg6[%c2, %c0_14] : memref<9x256xf32, #tpu.memory_space<vmem>>, vector<1x256xf32>
    %26 = vector.broadcast %25 : vector<1x256xf32> to vector<4x256xf32>
    %27 = arith.mulf %24, %26 : vector<4x256xf32>
    %c8 = arith.constant 8 : index
    %c0_15 = arith.constant 0 : index
    %28 = vector.load %arg9[%c8, %c0_15] : memref<36x256xf32, #tpu.memory_space<vmem>>, vector<4x256xf32>
    tpu.vector_store %arg9[%c8, %c0_15], %27 {strides = array<i32>} : memref<36x256xf32, #tpu.memory_space<vmem>>, vector<4x256xf32>,
    %c1_i32 = arith.constant 1 : i32
    %29 = tpu.dynamic_rotate %13 by %c1_i32 dim 1 : vector<4x256xf32>, i32 -> vector<4x256xf32>
    %c3 = arith.constant 3 : index
    %c0_16 = arith.constant 0 : index
    %30 = vector.load %arg6[%c3, %c0_16] : memref<9x256xf32, #tpu.memory_space<vmem>>, vector<1x256xf32>
    %31 = vector.broadcast %30 : vector<1x256xf32> to vector<4x256xf32>
    %32 = arith.mulf %29, %31 : vector<4x256xf32>
    %c12 = arith.constant 12 : index
    %c0_17 = arith.constant 0 : index
    %33 = vector.load %arg9[%c12, %c0_17] : memref<36x256xf32, #tpu.memory_space<vmem>>, vector<4x256xf32>
    tpu.vector_store %arg9[%c12, %c0_17], %32 {strides = array<i32>} : memref<36x256xf32, #tpu.memory_space<vmem>>, vector<4x256xf32>,
    %c16 = arith.constant 16 : index
    %c0_18 = arith.constant 0 : index
    %34 = vector.load %arg9[%c16, %c0_18] : memref<36x256xf32, #tpu.memory_space<vmem>>, vector<4x256xf32>
    tpu.vector_store %arg9[%c16, %c0_18], %13 {strides = array<i32>} : memref<36x256xf32, #tpu.memory_space<vmem>>, vector<4x256xf32>,
    %c255_i32 = arith.constant 255 : i32
    %35 = tpu.dynamic_rotate %13 by %c255_i32 dim 1 : vector<4x256xf32>, i32 -> vector<4x256xf32>
    %c5 = arith.constant 5 : index
    %c0_19 = arith.constant 0 : index
    %36 = vector.load %arg6[%c5, %c0_19] : memref<9x256xf32, #tpu.memory_space<vmem>>, vector<1x256xf32>
    %37 = vector.broadcast %36 : vector<1x256xf32> to vector<4x256xf32>
    %38 = arith.mulf %35, %37 : vector<4x256xf32>
    %c20 = arith.constant 20 : index
    %c0_20 = arith.constant 0 : index
    %39 = vector.load %arg9[%c20, %c0_20] : memref<36x256xf32, #tpu.memory_space<vmem>>, vector<4x256xf32>
    tpu.vector_store %arg9[%c20, %c0_20], %38 {strides = array<i32>} : memref<36x256xf32, #tpu.memory_space<vmem>>, vector<4x256xf32>,
    %c241_i32 = arith.constant 241 : i32
    %40 = tpu.dynamic_rotate %13 by %c241_i32 dim 1 : vector<4x256xf32>, i32 -> vector<4x256xf32>
    %c6 = arith.constant 6 : index
    %c0_21 = arith.constant 0 : index
    %41 = vector.load %arg6[%c6, %c0_21] : memref<9x256xf32, #tpu.memory_space<vmem>>, vector<1x256xf32>
    %42 = vector.broadcast %41 : vector<1x256xf32> to vector<4x256xf32>
    %43 = arith.mulf %40, %42 : vector<4x256xf32>
    %c24 = arith.constant 24 : index
    %c0_22 = arith.constant 0 : index
    %44 = vector.load %arg9[%c24, %c0_22] : memref<36x256xf32, #tpu.memory_space<vmem>>, vector<4x256xf32>
    tpu.vector_store %arg9[%c24, %c0_22], %43 {strides = array<i32>} : memref<36x256xf32, #tpu.memory_space<vmem>>, vector<4x256xf32>,
    %c240_i32 = arith.constant 240 : i32
    %45 = tpu.dynamic_rotate %13 by %c240_i32 dim 1 : vector<4x256xf32>, i32 -> vector<4x256xf32>
    %c7 = arith.constant 7 : index
    %c0_23 = arith.constant 0 : index
    %46 = vector.load %arg6[%c7, %c0_23] : memref<9x256xf32, #tpu.memory_space<vmem>>, vector<1x256xf32>
    %47 = vector.broadcast %46 : vector<1x256xf32> to vector<4x256xf32>
    %48 = arith.mulf %45, %47 : vector<4x256xf32>
    %c28 = arith.constant 28 : index
    %c0_24 = arith.constant 0 : index
    %49 = vector.load %arg9[%c28, %c0_24] : memref<36x256xf32, #tpu.memory_space<vmem>>, vector<4x256xf32>
    tpu.vector_store %arg9[%c28, %c0_24], %48 {strides = array<i32>} : memref<36x256xf32, #tpu.memory_space<vmem>>, vector<4x256xf32>,
    %c239_i32 = arith.constant 239 : i32
    %50 = tpu.dynamic_rotate %13 by %c239_i32 dim 1 : vector<4x256xf32>, i32 -> vector<4x256xf32>
    %c8_25 = arith.constant 8 : index
    %c0_26 = arith.constant 0 : index
    %51 = vector.load %arg6[%c8_25, %c0_26] : memref<9x256xf32, #tpu.memory_space<vmem>>, vector<1x256xf32>
    %52 = vector.broadcast %51 : vector<1x256xf32> to vector<4x256xf32>
    %53 = arith.mulf %50, %52 : vector<4x256xf32>
    %c32 = arith.constant 32 : index
    %c0_27 = arith.constant 0 : index
    %54 = vector.load %arg9[%c32, %c0_27] : memref<36x256xf32, #tpu.memory_space<vmem>>, vector<4x256xf32>
    tpu.vector_store %arg9[%c32, %c0_27], %53 {strides = array<i32>} : memref<36x256xf32, #tpu.memory_space<vmem>>, vector<4x256xf32>,
    %c0_28 = arith.constant 0 : index
    %c0_29 = arith.constant 0 : index
    %55 = vector.load %arg4[%c0_28, %c0_29] : memref<4x36xf32, #tpu.memory_space<vmem>>, vector<4x36xf32>
    %c0_30 = arith.constant 0 : index
    %c0_31 = arith.constant 0 : index
    %56 = vector.load %arg9[%c0_30, %c0_31] : memref<36x256xf32, #tpu.memory_space<vmem>>, vector<36x256xf32>
    %cst_32 = arith.constant dense<0.000000e+00> : vector<4x256xf32>
    %57 = tpu.matmul %55, %56, %cst_32 {dimension_numbers = #tpu.dot_dimension_numbers<[1], [0], [0], [1], [0, 0, 1, 1], [], []>} : vector<4x36xf32>, vector<36x256xf32>, vector<4x256xf32> -> vector<4x256xf32>
    %c0_33 = arith.constant 0 : index
    %c0_34 = arith.constant 0 : index
    %58 = vector.load %arg5[%c0_33, %c0_34] : memref<4x1xf32, #tpu.memory_space<vmem>>, vector<4x1xf32>
    %59 = vector.broadcast %58 : vector<4x1xf32> to vector<4x256xf32>
    %60 = arith.addf %57, %59 : vector<4x256xf32>
    %c0_35 = arith.constant 0 : index
    %c0_36 = arith.constant 0 : index
    %c0_37 = arith.constant 0 : index
    %61 = vector.load %arg8[%c0_35, %c0_36, %c0_37] : memref<1x4x256xf32, #tpu.memory_space<vmem>>, vector<1x4x256xf32>
    %62 = vector.shape_cast %61 : vector<1x4x256xf32> to vector<4x256xf32>
    %63 = vector.shape_cast %60 : vector<4x256xf32> to vector<1x4x256xf32>
    tpu.vector_store %arg8[%c0_35, %c0_36, %c0_37], %63 {strides = array<i32>} : memref<1x4x256xf32, #tpu.memory_space<vmem>>, vector<1x4x256xf32>,
    return
  }
  func.func @transform_0(%arg0: i32) -> (i32, i32, i32) {
    %c0_i32 = arith.constant 0 : i32
    %c0_i32_0 = arith.constant 0 : i32
    %c0_i32_1 = arith.constant 0 : i32
    return %arg0, %c0_i32, %c0_i32_0 : i32, i32, i32
  }
  func.func @transform_1(%arg0: i32) -> (i32, i32) {
    %c0_i32 = arith.constant 0 : i32
    %c0_i32_0 = arith.constant 0 : i32
    %c0_i32_1 = arith.constant 0 : i32
    return %c0_i32, %c0_i32_0 : i32, i32
  }
  func.func @transform_2(%arg0: i32) -> (i32, i32) {
    %c0_i32 = arith.constant 0 : i32
    %c0_i32_0 = arith.constant 0 : i32
    %c0_i32_1 = arith.constant 0 : i32
    return %c0_i32, %c0_i32_0 : i32, i32
  }
  func.func @transform_3(%arg0: i32) -> (i32, i32) {
    %c0_i32 = arith.constant 0 : i32
    %c0_i32_0 = arith.constant 0 : i32
    %c0_i32_1 = arith.constant 0 : i32
    return %c0_i32, %c0_i32_0 : i32, i32
  }
  func.func @transform_4(%arg0: i32) -> (i32, i32) {
    %c0_i32 = arith.constant 0 : i32
    %c0_i32_0 = arith.constant 0 : i32
    %c0_i32_1 = arith.constant 0 : i32
    return %c0_i32, %c0_i32_0 : i32, i32
  }
  func.func @transform_5(%arg0: i32) -> (i32, i32) {
    %c0_i32 = arith.constant 0 : i32
    %c0_i32_0 = arith.constant 0 : i32
    %c0_i32_1 = arith.constant 0 : i32
    return %c0_i32, %c0_i32_0 : i32, i32
  }
  func.func @transform_6(%arg0: i32) -> (i32, i32) {
    %c0_i32 = arith.constant 0 : i32
    %c0_i32_0 = arith.constant 0 : i32
    %c0_i32_1 = arith.constant 0 : i32
    return %c0_i32, %c0_i32_0 : i32, i32
  }
  func.func @transform_7(%arg0: i32) -> (i32, i32, i32) {
    %c0_i32 = arith.constant 0 : i32
    %c0_i32_0 = arith.constant 0 : i32
    %c0_i32_1 = arith.constant 0 : i32
    return %arg0, %c0_i32, %c0_i32_0 : i32, i32, i32
  }
}

module attributes {stable_mosaic.version = 11 : i64} {
  func.func @_stage3_kernel(%arg0: i32, %arg1: memref<1x4x256xf32, #tpu.memory_space<vmem>>, %arg2: memref<1x4x256xf32, #tpu.memory_space<vmem>>, %arg3: memref<4x1xf32, #tpu.memory_space<vmem>>, %arg4: memref<4x1xf32, #tpu.memory_space<vmem>>, %arg5: memref<1x1xf32, #tpu.memory_space<smem>>, %arg6: memref<1x4x256xf32, #tpu.memory_space<vmem>>) attributes {dimension_semantics = [#tpu.dimension_semantics<parallel>], iteration_bounds = array<i64: 2>, scalar_prefetch = 0 : i64, scratch_operands = 0 : i64, tpu.core_type = #tpu.core_type<tc>, window_params = [{transform_indices = @transform_0, window_bounds = array<i64: 1, 4, 256>}, {transform_indices = @transform_1, window_bounds = array<i64: 1, 4, 256>}, {pipeline_mode = #tpu.pipeline_mode<synchronous>, transform_indices = @transform_2, window_bounds = array<i64: 4, 1>}, {pipeline_mode = #tpu.pipeline_mode<synchronous>, transform_indices = @transform_3, window_bounds = array<i64: 4, 1>}, {transform_indices = @transform_4, window_bounds = array<i64: 1, 1>}, {transform_indices = @transform_5, window_bounds = array<i64: 1, 4, 256>}]} {
    %c0 = arith.constant 0 : index
    %c0_0 = arith.constant 0 : index
    %0 = memref.load %arg5[%c0, %c0_0] : memref<1x1xf32, #tpu.memory_space<smem>>
    %c0_1 = arith.constant 0 : index
    %c0_2 = arith.constant 0 : index
    %c0_3 = arith.constant 0 : index
    %1 = vector.load %arg1[%c0_1, %c0_2, %c0_3] : memref<1x4x256xf32, #tpu.memory_space<vmem>>, vector<1x4x256xf32>
    %c0_4 = arith.constant 0 : index
    %c0_5 = arith.constant 0 : index
    %2 = vector.load %arg3[%c0_4, %c0_5] : memref<4x1xf32, #tpu.memory_space<vmem>>, vector<4x1xf32>
    %3 = vector.shape_cast %2 : vector<4x1xf32> to vector<1x4x1xf32>
    %4 = vector.broadcast %3 : vector<1x4x1xf32> to vector<1x4x256xf32>
    %5 = arith.mulf %1, %4 : vector<1x4x256xf32>
    %c0_6 = arith.constant 0 : index
    %c0_7 = arith.constant 0 : index
    %6 = vector.load %arg4[%c0_6, %c0_7] : memref<4x1xf32, #tpu.memory_space<vmem>>, vector<4x1xf32>
    %7 = vector.shape_cast %6 : vector<4x1xf32> to vector<1x4x1xf32>
    %8 = vector.broadcast %7 : vector<1x4x1xf32> to vector<1x4x256xf32>
    %9 = arith.addf %5, %8 : vector<1x4x256xf32>
    %c0_8 = arith.constant 0 : index
    %c0_9 = arith.constant 0 : index
    %c0_10 = arith.constant 0 : index
    %10 = vector.load %arg2[%c0_8, %c0_9, %c0_10] : memref<1x4x256xf32, #tpu.memory_space<vmem>>, vector<1x4x256xf32>
    %11 = arith.addf %9, %10 : vector<1x4x256xf32>
    %cst = arith.constant 0.000000e+00 : f32
    %12 = vector.broadcast %cst : f32 to vector<1x4x256xf32>
    %13 = arith.cmpf oge, %11, %12 : vector<1x4x256xf32>
    %14 = vector.broadcast %0 : f32 to vector<1x4x256xf32>
    %15 = arith.mulf %14, %11 : vector<1x4x256xf32>
    %16 = arith.select %13, %11, %15 : vector<1x4x256xi1>, vector<1x4x256xf32>
    %c0_11 = arith.constant 0 : index
    %c0_12 = arith.constant 0 : index
    %c0_13 = arith.constant 0 : index
    %17 = vector.load %arg6[%c0_11, %c0_12, %c0_13] : memref<1x4x256xf32, #tpu.memory_space<vmem>>, vector<1x4x256xf32>
    tpu.vector_store %arg6[%c0_11, %c0_12, %c0_13], %16 {strides = array<i32>} : memref<1x4x256xf32, #tpu.memory_space<vmem>>, vector<1x4x256xf32>,
    return
  }
  func.func @transform_0(%arg0: i32) -> (i32, i32, i32) {
    %c0_i32 = arith.constant 0 : i32
    %c0_i32_0 = arith.constant 0 : i32
    %c0_i32_1 = arith.constant 0 : i32
    return %arg0, %c0_i32, %c0_i32_0 : i32, i32, i32
  }
  func.func @transform_1(%arg0: i32) -> (i32, i32, i32) {
    %c0_i32 = arith.constant 0 : i32
    %c0_i32_0 = arith.constant 0 : i32
    %c0_i32_1 = arith.constant 0 : i32
    return %arg0, %c0_i32, %c0_i32_0 : i32, i32, i32
  }
  func.func @transform_2(%arg0: i32) -> (i32, i32) {
    %c0_i32 = arith.constant 0 : i32
    %c0_i32_0 = arith.constant 0 : i32
    %c0_i32_1 = arith.constant 0 : i32
    return %c0_i32, %c0_i32_0 : i32, i32
  }
  func.func @transform_3(%arg0: i32) -> (i32, i32) {
    %c0_i32 = arith.constant 0 : i32
    %c0_i32_0 = arith.constant 0 : i32
    %c0_i32_1 = arith.constant 0 : i32
    return %c0_i32, %c0_i32_0 : i32, i32
  }
  func.func @transform_4(%arg0: i32) -> (i32, i32) {
    %c0_i32 = arith.constant 0 : i32
    %c0_i32_0 = arith.constant 0 : i32
    %c0_i32_1 = arith.constant 0 : i32
    return %c0_i32, %c0_i32_0 : i32, i32
  }
  func.func @transform_5(%arg0: i32) -> (i32, i32, i32) {
    %c0_i32 = arith.constant 0 : i32
    %c0_i32_0 = arith.constant 0 : i32
    %c0_i32_1 = arith.constant 0 : i32
    return %arg0, %c0_i32, %c0_i32_0 : i32, i32, i32
  }
}

</mosaic_0001>

<llo_original>
// kernel: resnet_block_forward.5
$region0: #{resnet_block_forward.5}
  #allocation0 [shape = 'u32[]', space=smem, size = 0x4, offset = 0x4, fixed_abs, tag = 'smem constant byte address 0x4 - core index']
  #allocation1 [shape = 'u32[144,128]{1,0:T(1,128)}', space=vmem, size = 0x12000, scoped, tag = 'internal scratch']
  #allocation2 [shape = 'f32[1,1]{1,0:T(1,128)S(6)}', space=smem, size = 0x200, scoped, tag = 'scoped memory for resnet_block_forward.5']
  %s0 = inlined_call_operand.vmem [shape: f32[2,4,256], index: 0, kind: input, shape index: {}]
  %s1 = inlined_call_operand.vmem [shape: f32[2,4,256], index: 1, kind: input, shape index: {}]
  %s2 = inlined_call_operand.vmem [shape: f32[4,1], index: 2, kind: input, shape index: {}]
  %s3 = inlined_call_operand.vmem [shape: f32[4,1], index: 3, kind: input, shape index: {}]
  %s4 = inlined_call_operand.<no memory space> [shape: f32[1,1], index: 4, kind: input, shape index: {}]
  %s5 = inlined_call_operand.vmem [shape: f32[2,4,256], index: 5, kind: output, shape index: {}]
  %s6 = sld [smem:[#allocation0]]
  $region53: #{resnet_block_forward.5} parent=0
    _
  %s8 = ssub.s32 1, %s6
  %s9 = scalar_select 0, %s8, %s6
  %10 = sst [smem:[#allocation2]] %s4
  loop: start=0, step=1, limit=4
  $region2: #{resnet_block_forward.5} parent=0 // loop_pre_header
    _
  $region3: #{resnet_block_forward.5} parent=0 // loop_header
    %s12 = sphi 0, %s16
    %p13 = scmp.ge.s32.totalorder %s12, 4
    %s22 = sphi 0, %s24
    %s25 = sphi 0, %s22
    %s26 = sphi 0, %s25
    %s42 = sphi 0, %s26
    %s48 = sphi 0, %s50
    %s51 = sphi 0, %s48
    %s52 = sphi 0, %s51
    %s68 = sphi 0, %s52
    %s72 = sphi 0, %s72
    %s74 = sphi 0, %s72
    %s75 = sphi 0, %s74
    %s89 = sphi 0, %s75
    %s93 = sphi 0, %s93
    %s95 = sphi 0, %s93
    %s96 = sphi 0, %s95
    %s110 = sphi 0, %s96
    %s114 = sphi 0, %s114
    %s116 = sphi 0, %s114
    %s117 = sphi 0, %s116
    %s131 = sphi 0, %s117
    %s137 = sphi 0, %s139
    %s140 = sphi 0, %s137
    %s141 = sphi 0, %s140
    %s157 = sphi 0, %s141
  $region4: #{resnet_block_forward.5} parent=0 // loop_header_branch
    %15 = sbr.rel (%p13) target = $region8
  $region5: #{resnet_block_forward.5} parent=0 // loop_body
    %s17 = ssub.s32 %s12, 1
    %s18 = ssub.s32 %s12, 2
    %s19 = sadd.s32 %s12, 1
    %s20 = ssub.s32 %s12, %s19
    %p21 = scmp.eq.s32.totalorder %s20, 0
    %s23 = sadd.s32 %s22, 1
    %s24 = scalar_select %p21, %s22, %s23
    %p27 = pneg %p21
    %p28 = scmp.eq.s32.totalorder %s12, 1
    %p29 = por %p27, %p28
    %p30 = scmp.ne.s32.totalorder %s22, %s25
    %p31 = scmp.eq.s32.totalorder %s12, 0
    %p32 = por %p30, %p31
    %p33 = scmp.ne.s32.totalorder %s22, %s25
    %p34 = scmp.eq.s32.totalorder %s17, 1
    %p35 = por %p33, %p34
    %p36 = scmp.ne.s32.totalorder %s25, %s26
    %p37 = scmp.eq.s32.totalorder %s17, 0
    %p38 = por %p36, %p37
    %p39 = scmp.ne.s32.totalorder %s25, %s26
    %p40 = scmp.eq.s32.totalorder %s18, 1
    %p41 = por %p39, %p40
    %p43 = scmp.ne.s32.totalorder %s26, %s42
    %p44 = scmp.eq.s32.totalorder %s18, 0
    %p45 = por %p43, %p44
    %s46 = ssub.s32 %s12, %s19
    %p47 = scmp.eq.s32.totalorder %s46, 0
    %s49 = sadd.s32 %s48, 1
    %s50 = scalar_select %p47, %s48, %s49
    %p53 = pneg %p47
    %p54 = scmp.eq.s32.totalorder %s12, 1
    %p55 = por %p53, %p54
    %p56 = scmp.ne.s32.totalorder %s48, %s51
    %p57 = scmp.eq.s32.totalorder %s12, 0
    %p58 = por %p56, %p57
    %p59 = scmp.ne.s32.totalorder %s48, %s51
    %p60 = scmp.eq.s32.totalorder %s17, 1
    %p61 = por %p59, %p60
    %p62 = scmp.ne.s32.totalorder %s51, %s52
    %p63 = scmp.eq.s32.totalorder %s17, 0
    %p64 = por %p62, %p63
    %p65 = scmp.ne.s32.totalorder %s51, %s52
    %p66 = scmp.eq.s32.totalorder %s18, 1
    %p67 = por %p65, %p66
    %p69 = scmp.ne.s32.totalorder %s52, %s68
    %p70 = scmp.eq.s32.totalorder %s18, 0
    %p71 = por %p69, %p70
    %s73 = sadd.s32 %s72, 1
    %p76 = scmp.eq.s32.totalorder %s12, 1
    %p77 = scmp.ne.s32.totalorder %s72, %s74
    %p78 = scmp.eq.s32.totalorder %s12, 0
    %p79 = por %p77, %p78
    %p80 = scmp.ne.s32.totalorder %s72, %s74
    %p81 = scmp.eq.s32.totalorder %s17, 1
    %p82 = por %p80, %p81
    %p83 = scmp.ne.s32.totalorder %s74, %s75
    %p84 = scmp.eq.s32.totalorder %s17, 0
    %p85 = por %p83, %p84
    %p86 = scmp.ne.s32.totalorder %s74, %s75
    %p87 = scmp.eq.s32.totalorder %s18, 1
    %p88 = por %p86, %p87
    %p90 = scmp.ne.s32.totalorder %s75, %s89
    %p91 = scmp.eq.s32.totalorder %s18, 0
    %p92 = por %p90, %p91
    %s94 = sadd.s32 %s93, 1
    %p97 = scmp.eq.s32.totalorder %s12, 1
    %p98 = scmp.ne.s32.totalorder %s93, %s95
    %p99 = scmp.eq.s32.totalorder %s12, 0
    %p100 = por %p98, %p99
    %p101 = scmp.ne.s32.totalorder %s93, %s95
    %p102 = scmp.eq.s32.totalorder %s17, 1
    %p103 = por %p101, %p102
    %p104 = scmp.ne.s32.totalorder %s95, %s96
    %p105 = scmp.eq.s32.totalorder %s17, 0
    %p106 = por %p104, %p105
    %p107 = scmp.ne.s32.totalorder %s95, %s96
    %p108 = scmp.eq.s32.totalorder %s18, 1
    %p109 = por %p107, %p108
    %p111 = scmp.ne.s32.totalorder %s96, %s110
    %p112 = scmp.eq.s32.totalorder %s18, 0
    %p113 = por %p111, %p112
    %s115 = sadd.s32 %s114, 1
    %p118 = scmp.eq.s32.totalorder %s12, 1
    %p119 = scmp.ne.s32.totalorder %s114, %s116
    %p120 = scmp.eq.s32.totalorder %s12, 0
    %p121 = por %p119, %p120
    %p122 = scmp.ne.s32.totalorder %s114, %s116
    %p123 = scmp.eq.s32.totalorder %s17, 1
    %p124 = por %p122, %p123
    %p125 = scmp.ne.s32.totalorder %s116, %s117
    %p126 = scmp.eq.s32.totalorder %s17, 0
    %p127 = por %p125, %p126
    %p128 = scmp.ne.s32.totalorder %s116, %s117
    %p129 = scmp.eq.s32.totalorder %s18, 1
    %p130 = por %p128, %p129
    %p132 = scmp.ne.s32.totalorder %s117, %s131
    %p133 = scmp.eq.s32.totalorder %s18, 0
    %p134 = por %p132, %p133
    %s135 = ssub.s32 %s12, %s19
    %p136 = scmp.eq.s32.totalorder %s135, 0
    %s138 = sadd.s32 %s137, 1
    %s139 = scalar_select %p136, %s137, %s138
    %p142 = pneg %p136
    %p143 = scmp.eq.s32.totalorder %s12, 1
    %p144 = por %p142, %p143
    %p145 = scmp.ne.s32.totalorder %s137, %s140
    %p146 = scmp.eq.s32.totalorder %s12, 0
    %p147 = por %p145, %p146
    %p148 = scmp.ne.s32.totalorder %s137, %s140
    %p149 = scmp.eq.s32.totalorder %s17, 1
    %p150 = por %p148, %p149
    %p151 = scmp.ne.s32.totalorder %s140, %s141
    %p152 = scmp.eq.s32.totalorder %s17, 0
    %p153 = por %p151, %p152
    %p154 = scmp.ne.s32.totalorder %s140, %s141
    %p155 = scmp.eq.s32.totalorder %s18, 1
    %p156 = por %p154, %p155
    %p158 = scmp.ne.s32.totalorder %s141, %s157
    %p159 = scmp.eq.s32.totalorder %s18, 0
    %p160 = por %p158, %p159
    %p161 = scmp.le.s32.totalorder 1, %s12
    %p162 = scmp.lt.s32.totalorder %s12, 3
    %p163 = pnand %p161, %p162
    %p164 = pneg %p163
    // Predicated region
    $region9: #{resnet_block_forward.5} parent=5 // pred_check
      _
    $region10: #{resnet_block_forward.5} parent=5 // pred_check_branch
      %166 = sbr.rel (%p163) target = $region12
    $region11: #{resnet_block_forward.5} parent=5 // pred_region
      %s167 = ssub.s32 %s12, 1
      // Predicated region
      $region13: #{resnet_block_forward.5} parent=11 // pred_check
        %p168 = pneg %p85
      $region14: #{resnet_block_forward.5} parent=11 // pred_check_branch
        %170 = sbr.rel (%p168) target = $region16
      $region15: #{resnet_block_forward.5} parent=11 // pred_region
        _
      $region16: #{resnet_block_forward.5} parent=11 // pred_fallthru
        _
      // Predicated region
      $region17: #{resnet_block_forward.5} parent=11 // pred_check
        %p171 = pneg %p106
      $region18: #{resnet_block_forward.5} parent=11 // pred_check_branch
        %173 = sbr.rel (%p171) target = $region20
      $region19: #{resnet_block_forward.5} parent=11 // pred_region
        _
      $region20: #{resnet_block_forward.5} parent=11 // pred_fallthru
        _
      // Predicated region
      $region21: #{resnet_block_forward.5} parent=11 // pred_check
        %p174 = pneg %p127
      $region22: #{resnet_block_forward.5} parent=11 // pred_check_branch
        %176 = sbr.rel (%p174) target = $region24
      $region23: #{resnet_block_forward.5} parent=11 // pred_region
        _
      $region24: #{resnet_block_forward.5} parent=11 // pred_fallthru
        _
    $region12: #{resnet_block_forward.5} parent=5 // pred_fallthru
      _
    %p177 = scmp.lt.s32.totalorder %s12, 2
    // Predicated region
    $region25: #{resnet_block_forward.5} parent=5 // pred_check
      %p178 = pneg %p177
    $region26: #{resnet_block_forward.5} parent=5 // pred_check_branch
      %180 = sbr.rel (%p178) target = $region28
    $region27: #{resnet_block_forward.5} parent=5 // pred_region
      // Predicated region
      $region29: #{resnet_block_forward.5} parent=27 // pred_check
        %p181 = pneg %p32
      $region30: #{resnet_block_forward.5} parent=27 // pred_check_branch
        %183 = sbr.rel (%p181) target = $region32
      $region31: #{resnet_block_forward.5} parent=27 // pred_region
        %p184 = scmp.lt.s32.totalorder %s12, 1
        %s185 = scalar_select %p184, %s12, 1
        %s186 = smul.addr %s185, 2
        %s187 = smul.addr %s186, 4
        %s188 = scalar_lea.vmem %s0, %s187
      $region32: #{resnet_block_forward.5} parent=27 // pred_fallthru
        _
      // Predicated region
      $region33: #{resnet_block_forward.5} parent=27 // pred_check
        %p189 = pneg %p58
      $region34: #{resnet_block_forward.5} parent=27 // pred_check_branch
        %191 = sbr.rel (%p189) target = $region36
      $region35: #{resnet_block_forward.5} parent=27 // pred_region
        %p192 = scmp.lt.s32.totalorder %s12, 1
        %s193 = scalar_select %p192, %s12, 1
        %s194 = smul.addr %s193, 2
        %s195 = smul.addr %s194, 4
        %s196 = scalar_lea.vmem %s1, %s195
      $region36: #{resnet_block_forward.5} parent=27 // pred_fallthru
        _
    $region28: #{resnet_block_forward.5} parent=5 // pred_fallthru
      _
    %p197 = scmp.le.s32.totalorder 1, %s12
    %p198 = scmp.lt.s32.totalorder %s12, 3
    %p199 = pnand %p197, %p198
    %p200 = pneg %p199
    // Predicated region
    $region37: #{resnet_block_forward.5} parent=5 // pred_check
      _
    $region38: #{resnet_block_forward.5} parent=5 // pred_check_branch
      %202 = sbr.rel (%p199) target = $region40
    $region39: #{resnet_block_forward.5} parent=5 // pred_region
      %s203 = ssub.s32 %s12, 1
      %p204 = scmp.lt.s32.totalorder %s17, 1
      %s205 = scalar_select %p204, %s17, 1
      %s206 = smul.addr %s205, 2
      %s207 = smul.addr %s206, 4
      %s208 = scalar_lea.vmem %s0, %s207
      %p209 = pneg %p38
      %p210 = pneg %p35
      %p211 = scmp.lt.s32.totalorder %s17, 1
      %s212 = scalar_select %p211, %s17, 1
      %s213 = smul.addr %s212, 2
      %s214 = smul.addr %s213, 4
      %s215 = scalar_lea.vmem %s1, %s214
      %p216 = pneg %p64
      %p217 = pneg %p61
      %p218 = pneg %p85
      %p219 = pneg %p82
      %p220 = pneg %p106
      %p221 = pneg %p103
      %p222 = pneg %p127
      %p223 = pneg %p124
      %p224 = pneg %p153
      %p225 = pneg %p150
      %p226 = scmp.lt.s32.totalorder %s17, 1
      %s227 = scalar_select %p226, %s17, 1
      %s228 = smul.addr %s227, 2
      %s229 = smul.addr %s228, 4
      %s230 = scalar_lea.vmem %s5, %s229
      %p231 = scmp.lt.s32.totalorder %s17, 1
      %s232 = scalar_select %p231, %s17, 1
      %s233 = smul.addr %s232, 2
      %s234 = smul.addr %s233, 4
      %s235 = scalar_lea.vmem %s0, %s234
      %p236 = scmp.lt.s32.totalorder %s17, 1
      %s237 = scalar_select %p236, %s17, 1
      %s238 = smul.addr %s237, 2
      %s239 = smul.addr %s238, 4
      %s240 = scalar_lea.vmem %s1, %s239
      %p241 = scmp.lt.s32.totalorder %s17, 1
      %s242 = scalar_select %p241, %s17, 1
      %s243 = smul.addr %s242, 2
      %s244 = smul.addr %s243, 4
      %s245 = scalar_lea.vmem %s5, %s244
      %s246 = sld [smem:[#allocation2]]
      %v247 = vld [vmem:[%s235] sm:$0xff]
      %v248 = vld [vmem:[%s2] sm:$0xf]
      %250 = vset.pattern.permute.xlu0 0
      %251 = vperm.xlu0 %250, %v248
      %v252 = vpop.permute.xlu0 %251
      %v254 = vunpack.c.l.s4 839922192
      %v255 = vunpack.c.0.s8 %v254
      %v256 = vlaneseq
      %v257 = vshrl.u32 %v256, 7
      %v258 = vsub.s32 %v255, %v257
      %v259 = vrot.slane %v252, %v258
      %v261 = vmul.f32 %v247, %v259
      %v262 = vld [vmem:[%s3] sm:$0xf]
      %264 = vset.pattern.permute.xlu0 0
      %265 = vperm.xlu0 %264, %v262
      %v266 = vpop.permute.xlu0 %265
      %v268 = vunpack.c.l.s4 839922192
      %v269 = vunpack.c.0.s8 %v268
      %v270 = vlaneseq
      %v271 = vshrl.u32 %v270, 7
      %v272 = vsub.s32 %v269, %v271
      %v273 = vrot.slane %v266, %v272
      %v275 = vadd.f32 %v261, %v273
      %v276 = vld [vmem:[%s240] sm:$0xff]
      %v277 = vadd.f32 %v275, %v276
      %vm278 = vcmp.ge.f32.partialorder %v277, 0.0
      %v279 = vstv %s246
      %v280 = vmul.f32 %v279, %v277
      %v281 = vsel %vm278, %v277, %v280
      %282 = vst [vmem:[%s245] sm:$0xff] %v281
      %p283 = scmp.lt.s32.totalorder %s17, 1
      %s284 = scalar_select %p283, %s17, 1
      %s285 = smul.addr %s284, 2
      %s286 = smul.addr %s285, 4
      %s287 = scalar_lea.vmem %s5, %s286
      // Predicated region
      $region41: #{resnet_block_forward.5} parent=39 // pred_check
        %p288 = pneg %p150
      $region42: #{resnet_block_forward.5} parent=39 // pred_check_branch
        %290 = sbr.rel (%p288) target = $region44
      $region43: #{resnet_block_forward.5} parent=39 // pred_region
        _
      $region44: #{resnet_block_forward.5} parent=39 // pred_fallthru
        _
    $region40: #{resnet_block_forward.5} parent=5 // pred_fallthru
      _
    %p291 = scmp.le.s32.totalorder 2, %s12
    // Predicated region
    $region45: #{resnet_block_forward.5} parent=5 // pred_check
      %p292 = pneg %p291
    $region46: #{resnet_block_forward.5} parent=5 // pred_check_branch
      %294 = sbr.rel (%p292) target = $region48
    $region47: #{resnet_block_forward.5} parent=5 // pred_region
      %s295 = ssub.s32 %s12, 2
      // Predicated region
      $region49: #{resnet_block_forward.5} parent=47 // pred_check
        %p296 = pneg %p156
      $region50: #{resnet_block_forward.5} parent=47 // pred_check_branch
        %298 = sbr.rel (%p296) target = $region52
      $region51: #{resnet_block_forward.5} parent=47 // pred_region
        %p299 = scmp.lt.s32.totalorder %s18, 1
        %s300 = scalar_select %p299, %s18, 1
        %s301 = smul.addr %s300, 2
        %s302 = smul.addr %s301, 4
        %s303 = scalar_lea.vmem %s5, %s302
      $region52: #{resnet_block_forward.5} parent=47 // pred_fallthru
        _
    $region48: #{resnet_block_forward.5} parent=5 // pred_fallthru
      _
  $region6: #{resnet_block_forward.5} parent=0 // loop_footer
    %s16 = sadd.s32 1, %s12
  $region7: #{resnet_block_forward.5} parent=0 // loop_footer_branch
    %11 = sbr.rel target = $region3
  $region8: #{resnet_block_forward.5} parent=0 // loop_exit
    _

// kernel: resnet_block_forward.3
$region0: #{resnet_block_forward.3}
  #allocation0 [shape = 'u32[]', space=smem, size = 0x4, offset = 0x4, fixed_abs, tag = 'smem constant byte address 0x4 - core index']
  #allocation1 [shape = 'u32[144,128]{1,0:T(1,128)}', space=vmem, size = 0x12000, scoped, tag = 'internal scratch']
  #allocation2 [shape = 'f32[36,256]{1,0:T(8,128)}', space=vmem, size = 0xa000, scoped, tag = 'scratch operand']
  %s0 = inlined_call_operand.vmem [shape: f32[2,4,256], index: 0, kind: input, shape index: {}]
  %s1 = inlined_call_operand.vmem [shape: f32[4,36], index: 1, kind: input, shape index: {}]
  %s2 = inlined_call_operand.vmem [shape: f32[4,1], index: 2, kind: input, shape index: {}]
  %s3 = inlined_call_operand.vmem [shape: f32[9,256], index: 3, kind: input, shape index: {}]
  %s4 = inlined_call_operand.vmem [shape: f32[2,4,256], index: 4, kind: output, shape index: {}]
  %s5 = sld [smem:[#allocation0]]
  $region49: #{resnet_block_forward.3} parent=0
    _
  %s7 = ssub.s32 1, %s5
  %s8 = scalar_select 0, %s7, %s5
  loop: start=0, step=1, limit=4
  $region2: #{resnet_block_forward.3} parent=0 // loop_pre_header
    _
  $region3: #{resnet_block_forward.3} parent=0 // loop_header
    %s10 = sphi 0, %s14
    %p11 = scmp.ge.s32.totalorder %s10, 4
    %s20 = sphi 0, %s22
    %s23 = sphi 0, %s20
    %s24 = sphi 0, %s23
    %s40 = sphi 0, %s24
    %s44 = sphi 0, %s44
    %s46 = sphi 0, %s44
    %s47 = sphi 0, %s46
    %s61 = sphi 0, %s47
    %s65 = sphi 0, %s65
    %s67 = sphi 0, %s65
    %s68 = sphi 0, %s67
    %s82 = sphi 0, %s68
    %s86 = sphi 0, %s86
    %s88 = sphi 0, %s86
    %s89 = sphi 0, %s88
    %s103 = sphi 0, %s89
    %s109 = sphi 0, %s111
    %s112 = sphi 0, %s109
    %s113 = sphi 0, %s112
    %s129 = sphi 0, %s113
  $region4: #{resnet_block_forward.3} parent=0 // loop_header_branch
    %13 = sbr.rel (%p11) target = $region8
  $region5: #{resnet_block_forward.3} parent=0 // loop_body
    %s15 = ssub.s32 %s10, 1
    %s16 = ssub.s32 %s10, 2
    %s17 = sadd.s32 %s10, 1
    %s18 = ssub.s32 %s10, %s17
    %p19 = scmp.eq.s32.totalorder %s18, 0
    %s21 = sadd.s32 %s20, 1
    %s22 = scalar_select %p19, %s20, %s21
    %p25 = pneg %p19
    %p26 = scmp.eq.s32.totalorder %s10, 1
    %p27 = por %p25, %p26
    %p28 = scmp.ne.s32.totalorder %s20, %s23
    %p29 = scmp.eq.s32.totalorder %s10, 0
    %p30 = por %p28, %p29
    %p31 = scmp.ne.s32.totalorder %s20, %s23
    %p32 = scmp.eq.s32.totalorder %s15, 1
    %p33 = por %p31, %p32
    %p34 = scmp.ne.s32.totalorder %s23, %s24
    %p35 = scmp.eq.s32.totalorder %s15, 0
    %p36 = por %p34, %p35
    %p37 = scmp.ne.s32.totalorder %s23, %s24
    %p38 = scmp.eq.s32.totalorder %s16, 1
    %p39 = por %p37, %p38
    %p41 = scmp.ne.s32.totalorder %s24, %s40
    %p42 = scmp.eq.s32.totalorder %s16, 0
    %p43 = por %p41, %p42
    %s45 = sadd.s32 %s44, 1
    %p48 = scmp.eq.s32.totalorder %s10, 1
    %p49 = scmp.ne.s32.totalorder %s44, %s46
    %p50 = scmp.eq.s32.totalorder %s10, 0
    %p51 = por %p49, %p50
    %p52 = scmp.ne.s32.totalorder %s44, %s46
    %p53 = scmp.eq.s32.totalorder %s15, 1
    %p54 = por %p52, %p53
    %p55 = scmp.ne.s32.totalorder %s46, %s47
    %p56 = scmp.eq.s32.totalorder %s15, 0
    %p57 = por %p55, %p56
    %p58 = scmp.ne.s32.totalorder %s46, %s47
    %p59 = scmp.eq.s32.totalorder %s16, 1
    %p60 = por %p58, %p59
    %p62 = scmp.ne.s32.totalorder %s47, %s61
    %p63 = scmp.eq.s32.totalorder %s16, 0
    %p64 = por %p62, %p63
    %s66 = sadd.s32 %s65, 1
    %p69 = scmp.eq.s32.totalorder %s10, 1
    %p70 = scmp.ne.s32.totalorder %s65, %s67
    %p71 = scmp.eq.s32.totalorder %s10, 0
    %p72 = por %p70, %p71
    %p73 = scmp.ne.s32.totalorder %s65, %s67
    %p74 = scmp.eq.s32.totalorder %s15, 1
    %p75 = por %p73, %p74
    %p76 = scmp.ne.s32.totalorder %s67, %s68
    %p77 = scmp.eq.s32.totalorder %s15, 0
    %p78 = por %p76, %p77
    %p79 = scmp.ne.s32.totalorder %s67, %s68
    %p80 = scmp.eq.s32.totalorder %s16, 1
    %p81 = por %p79, %p80
    %p83 = scmp.ne.s32.totalorder %s68, %s82
    %p84 = scmp.eq.s32.totalorder %s16, 0
    %p85 = por %p83, %p84
    %s87 = sadd.s32 %s86, 1
    %p90 = scmp.eq.s32.totalorder %s10, 1
    %p91 = scmp.ne.s32.totalorder %s86, %s88
    %p92 = scmp.eq.s32.totalorder %s10, 0
    %p93 = por %p91, %p92
    %p94 = scmp.ne.s32.totalorder %s86, %s88
    %p95 = scmp.eq.s32.totalorder %s15, 1
    %p96 = por %p94, %p95
    %p97 = scmp.ne.s32.totalorder %s88, %s89
    %p98 = scmp.eq.s32.totalorder %s15, 0
    %p99 = por %p97, %p98
    %p100 = scmp.ne.s32.totalorder %s88, %s89
    %p101 = scmp.eq.s32.totalorder %s16, 1
    %p102 = por %p100, %p101
    %p104 = scmp.ne.s32.totalorder %s89, %s103
    %p105 = scmp.eq.s32.totalorder %s16, 0
    %p106 = por %p104, %p105
    %s107 = ssub.s32 %s10, %s17
    %p108 = scmp.eq.s32.totalorder %s107, 0
    %s110 = sadd.s32 %s109, 1
    %s111 = scalar_select %p108, %s109, %s110
    %p114 = pneg %p108
    %p115 = scmp.eq.s32.totalorder %s10, 1
    %p116 = por %p114, %p115
    %p117 = scmp.ne.s32.totalorder %s109, %s112
    %p118 = scmp.eq.s32.totalorder %s10, 0
    %p119 = por %p117, %p118
    %p120 = scmp.ne.s32.totalorder %s109, %s112
    %p121 = scmp.eq.s32.totalorder %s15, 1
    %p122 = por %p120, %p121
    %p123 = scmp.ne.s32.totalorder %s112, %s113
    %p124 = scmp.eq.s32.totalorder %s15, 0
    %p125 = por %p123, %p124
    %p126 = scmp.ne.s32.totalorder %s112, %s113
    %p127 = scmp.eq.s32.totalorder %s16, 1
    %p128 = por %p126, %p127
    %p130 = scmp.ne.s32.totalorder %s113, %s129
    %p131 = scmp.eq.s32.totalorder %s16, 0
    %p132 = por %p130, %p131
    %p133 = scmp.le.s32.totalorder 1, %s10
    %p134 = scmp.lt.s32.totalorder %s10, 3
    %p135 = pnand %p133, %p134
    %p136 = pneg %p135
    // Predicated region
    $region9: #{resnet_block_forward.3} parent=5 // pred_check
      _
    $region10: #{resnet_block_forward.3} parent=5 // pred_check_branch
      %138 = sbr.rel (%p135) target = $region12
    $region11: #{resnet_block_forward.3} parent=5 // pred_region
      %s139 = ssub.s32 %s10, 1
      // Predicated region
      $region13: #{resnet_block_forward.3} parent=11 // pred_check
        %p140 = pneg %p57
      $region14: #{resnet_block_forward.3} parent=11 // pred_check_branch
        %142 = sbr.rel (%p140) target = $region16
      $region15: #{resnet_block_forward.3} parent=11 // pred_region
        _
      $region16: #{resnet_block_forward.3} parent=11 // pred_fallthru
        _
      // Predicated region
      $region17: #{resnet_block_forward.3} parent=11 // pred_check
        %p143 = pneg %p78
      $region18: #{resnet_block_forward.3} parent=11 // pred_check_branch
        %145 = sbr.rel (%p143) target = $region20
      $region19: #{resnet_block_forward.3} parent=11 // pred_region
        _
      $region20: #{resnet_block_forward.3} parent=11 // pred_fallthru
        _
      // Predicated region
      $region21: #{resnet_block_forward.3} parent=11 // pred_check
        %p146 = pneg %p99
      $region22: #{resnet_block_forward.3} parent=11 // pred_check_branch
        %148 = sbr.rel (%p146) target = $region24
      $region23: #{resnet_block_forward.3} parent=11 // pred_region
        _
      $region24: #{resnet_block_forward.3} parent=11 // pred_fallthru
        _
    $region12: #{resnet_block_forward.3} parent=5 // pred_fallthru
      _
    %p149 = scmp.lt.s32.totalorder %s10, 2
    // Predicated region
    $region25: #{resnet_block_forward.3} parent=5 // pred_check
      %p150 = pneg %p149
    $region26: #{resnet_block_forward.3} parent=5 // pred_check_branch
      %152 = sbr.rel (%p150) target = $region28
    $region27: #{resnet_block_forward.3} parent=5 // pred_region
      // Predicated region
      $region29: #{resnet_block_forward.3} parent=27 // pred_check
        %p153 = pneg %p30
      $region30: #{resnet_block_forward.3} parent=27 // pred_check_branch
        %155 = sbr.rel (%p153) target = $region32
      $region31: #{resnet_block_forward.3} parent=27 // pred_region
        %p156 = scmp.lt.s32.totalorder %s10, 1
        %s157 = scalar_select %p156, %s10, 1
        %s158 = smul.addr %s157, 2
        %s159 = smul.addr %s158, 4
        %s160 = scalar_lea.vmem %s0, %s159
      $region32: #{resnet_block_forward.3} parent=27 // pred_fallthru
        _
    $region28: #{resnet_block_forward.3} parent=5 // pred_fallthru
      _
    %p161 = scmp.le.s32.totalorder 1, %s10
    %p162 = scmp.lt.s32.totalorder %s10, 3
    %p163 = pnand %p161, %p162
    %p164 = pneg %p163
    // Predicated region
    $region33: #{resnet_block_forward.3} parent=5 // pred_check
      _
    $region34: #{resnet_block_forward.3} parent=5 // pred_check_branch
      %166 = sbr.rel (%p163) target = $region36
    $region35: #{resnet_block_forward.3} parent=5 // pred_region
      %s167 = ssub.s32 %s10, 1
      %p168 = scmp.lt.s32.totalorder %s15, 1
      %s169 = scalar_select %p168, %s15, 1
      %s170 = smul.addr %s169, 2
      %s171 = smul.addr %s170, 4
      %s172 = scalar_lea.vmem %s0, %s171
      %p173 = pneg %p36
      %p174 = pneg %p33
      %p175 = pneg %p57
      %p176 = pneg %p54
      %p177 = pneg %p78
      %p178 = pneg %p75
      %p179 = pneg %p99
      %p180 = pneg %p96
      %p181 = pneg %p125
      %p182 = pneg %p122
      %p183 = scmp.lt.s32.totalorder %s15, 1
      %s184 = scalar_select %p183, %s15, 1
      %s185 = smul.addr %s184, 2
      %s186 = smul.addr %s185, 4
      %s187 = scalar_lea.vmem %s4, %s186
      %p188 = scmp.lt.s32.totalorder %s15, 1
      %s189 = scalar_select %p188, %s15, 1
      %s190 = smul.addr %s189, 2
      %s191 = smul.addr %s190, 4
      %s192 = scalar_lea.vmem %s0, %s191
      %p193 = scmp.lt.s32.totalorder %s15, 1
      %s194 = scalar_select %p193, %s15, 1
      %s195 = smul.addr %s194, 2
      %s196 = smul.addr %s195, 4
      %s197 = scalar_lea.vmem %s4, %s196
      %v198 = vld [vmem:[%s192] sm:$0xff]
      %v200 = vcombine.high %v198, %v198
      %202 = vrot.lane.b32.xlu0 %v198, 17
      %v203 = vpop.permute.xlu0 %202
      %204 = vrot.lane.b32.xlu0 %v200, 17
      %v205 = vpop.permute.xlu0 %204
      %v206 = vlaneseq
      %v207 = vand.u32 %v206, 127
      %vm208 = vcmp.lt.s32.totalorder %v207, 17
      %v209 = vsel %vm208, %v203, %v205
      %v210 = vsel %vm208, %v205, %v203
      %v211 = vld [vmem:[%s3] ss:$8 sm:$0x3]
      %v213 = vlaneseq
      %v214 = vshrl.u32 %v213, 7
      %v215 = vsub.s32 0, %v214
      %v216 = vrot.slane %v211, %v215
      %v217 = vlaneseq
      %v218 = vshrl.u32 %v217, 7
      %v219 = vsub.s32 1, %v218
      %v220 = vrot.slane %v211, %v219
      %v223 = vmul.f32 %v210, %v216
      %v224 = vmul.f32 %v209, %v220
      %225 = vst [vmem:[#allocation2] sm:$0xf] %v223
      %226 = vst [vmem:[#allocation2 + $0x8] sm:$0xf] %v224
      %227 = vrot.lane.b32.xlu0 %v198, 16
      %v228 = vpop.permute.xlu0 %227
      %229 = vrot.lane.b32.xlu0 %v200, 16
      %v230 = vpop.permute.xlu0 %229
      %vm231 = vcmp.lt.s32.totalorder %v207, 16
      %v232 = vsel %vm231, %v228, %v230
      %v233 = vsel %vm231, %v230, %v228
      %s234 = scalar_lea.vmem %s3, 1
      %v235 = vld [vmem:[%s234] ss:$8 sm:$0x3]
      %v237 = vlaneseq
      %v238 = vshrl.u32 %v237, 7
      %v239 = vsub.s32 0, %v238
      %v240 = vrot.slane %v235, %v239
      %v241 = vlaneseq
      %v242 = vshrl.u32 %v241, 7
      %v243 = vsub.s32 1, %v242
      %v244 = vrot.slane %v235, %v243
      %v247 = vmul.f32 %v233, %v240
      %v248 = vmul.f32 %v232, %v244
      %v251 = vrot.slane %v247, 4
      %v252 = vrot.slane %v248, 4
      %255 = vst [vmem:[#allocation2] sm:$0xf0] %v251
      %256 = vst [vmem:[#allocation2 + $0x8] sm:$0xf0] %v252
      %257 = vrot.lane.b32.xlu0 %v198, 15
      %v258 = vpop.permute.xlu0 %257
      %259 = vrot.lane.b32.xlu0 %v200, 15
      %v260 = vpop.permute.xlu0 %259
      %vm261 = vcmp.lt.s32.totalorder %v207, 15
      %v262 = vsel %vm261, %v258, %v260
      %v263 = vsel %vm261, %v260, %v258
      %s264 = scalar_lea.vmem %s3, 2
      %v265 = vld [vmem:[%s264] ss:$8 sm:$0x3]
      %v267 = vlaneseq
      %v268 = vshrl.u32 %v267, 7
      %v269 = vsub.s32 0, %v268
      %v270 = vrot.slane %v265, %v269
      %v271 = vlaneseq
      %v272 = vshrl.u32 %v271, 7
      %v273 = vsub.s32 1, %v272
      %v274 = vrot.slane %v265, %v273
      %v277 = vmul.f32 %v263, %v270
      %v278 = vmul.f32 %v262, %v274
      %279 = vst [vmem:[#allocation2 + $0x10] sm:$0xf] %v277
      %280 = vst [vmem:[#allocation2 + $0x18] sm:$0xf] %v278
      %281 = vrot.lane.b32.xlu0 %v198, 1
      %v282 = vpop.permute.xlu0 %281
      %283 = vrot.lane.b32.xlu0 %v200, 1
      %v284 = vpop.permute.xlu0 %283
      %vm285 = vcmp.lt.s32.totalorder %v207, 1
      %v286 = vsel %vm285, %v282, %v284
      %v287 = vsel %vm285, %v284, %v282
      %s288 = scalar_lea.vmem %s3, 3
      %v289 = vld [vmem:[%s288] ss:$8 sm:$0x3]
      %v291 = vlaneseq
      %v292 = vshrl.u32 %v291, 7
      %v293 = vsub.s32 0, %v292
      %v294 = vrot.slane %v289, %v293
      %v295 = vlaneseq
      %v296 = vshrl.u32 %v295, 7
      %v297 = vsub.s32 1, %v296
      %v298 = vrot.slane %v289, %v297
      %v301 = vmul.f32 %v287, %v294
      %v302 = vmul.f32 %v286, %v298
      %v305 = vrot.slane %v301, 4
      %v306 = vrot.slane %v302, 4
      %309 = vst [vmem:[#allocation2 + $0x10] sm:$0xf0] %v305
      %310 = vst [vmem:[#allocation2 + $0x18] sm:$0xf0] %v306
      %311 = vst [vmem:[#allocation2 + $0x20] sm:$0xf] %v198
      %312 = vst [vmem:[#allocation2 + $0x28] sm:$0xf] %v200
      %313 = vrot.lane.b32.xlu0 %v198, 127
      %v314 = vpop.permute.xlu0 %313
      %315 = vrot.lane.b32.xlu0 %v200, 127
      %v316 = vpop.permute.xlu0 %315
      %vm317 = vcmp.lt.s32.totalorder %v207, 127
      %v318 = vsel %vm317, %v314, %v316
      %v319 = vsel %vm317, %v316, %v314
      %s320 = scalar_lea.vmem %s3, 5
      %v321 = vld [vmem:[%s320] ss:$8 sm:$0x3]
      %v323 = vlaneseq
      %v324 = vshrl.u32 %v323, 7
      %v325 = vsub.s32 0, %v324
      %v326 = vrot.slane %v321, %v325
      %v327 = vlaneseq
      %v328 = vshrl.u32 %v327, 7
      %v329 = vsub.s32 1, %v328
      %v330 = vrot.slane %v321, %v329
      %v333 = vmul.f32 %v318, %v326
      %v334 = vmul.f32 %v319, %v330
      %v337 = vrot.slane %v333, 4
      %v338 = vrot.slane %v334, 4
      %341 = vst [vmem:[#allocation2 + $0x20] sm:$0xf0] %v337
      %342 = vst [vmem:[#allocation2 + $0x28] sm:$0xf0] %v338
      %343 = vrot.lane.b32.xlu0 %v198, 113
      %v344 = vpop.permute.xlu0 %343
      %345 = vrot.lane.b32.xlu0 %v200, 113
      %v346 = vpop.permute.xlu0 %345
      %vm347 = vcmp.lt.s32.totalorder %v207, 113
      %v348 = vsel %vm347, %v344, %v346
      %v349 = vsel %vm347, %v346, %v344
      %s350 = scalar_lea.vmem %s3, 6
      %v351 = vld [vmem:[%s350] ss:$8 sm:$0x3]
      %v353 = vlaneseq
      %v354 = vshrl.u32 %v353, 7
      %v355 = vsub.s32 0, %v354
      %v356 = vrot.slane %v351, %v355
      %v357 = vlaneseq
      %v358 = vshrl.u32 %v357, 7
      %v359 = vsub.s32 1, %v358
      %v360 = vrot.slane %v351, %v359
      %v363 = vmul.f32 %v348, %v356
      %v364 = vmul.f32 %v349, %v360
      %365 = vst [vmem:[#allocation2 + $0x30] sm:$0xf] %v363
      %366 = vst [vmem:[#allocation2 + $0x38] sm:$0xf] %v364
      %367 = vrot.lane.b32.xlu0 %v198, 112
      %v368 = vpop.permute.xlu0 %367
      %369 = vrot.lane.b32.xlu0 %v200, 112
      %v370 = vpop.permute.xlu0 %369
      %vm371 = vcmp.lt.s32.totalorder %v207, 112
      %v372 = vsel %vm371, %v368, %v370
      %v373 = vsel %vm371, %v370, %v368
      %s374 = scalar_lea.vmem %s3, 7
      %v375 = vld [vmem:[%s374] ss:$8 sm:$0x3]
      %v377 = vlaneseq
      %v378 = vshrl.u32 %v377, 7
      %v379 = vsub.s32 0, %v378
      %v380 = vrot.slane %v375, %v379
      %v381 = vlaneseq
      %v382 = vshrl.u32 %v381, 7
      %v383 = vsub.s32 1, %v382
      %v384 = vrot.slane %v375, %v383
      %v387 = vmul.f32 %v372, %v380
      %v388 = vmul.f32 %v373, %v384
      %v391 = vrot.slane %v387, 4
      %v392 = vrot.slane %v388, 4
      %395 = vst [vmem:[#allocation2 + $0x30] sm:$0xf0] %v391
      %396 = vst [vmem:[#allocation2 + $0x38] sm:$0xf0] %v392
      %397 = vrot.lane.b32.xlu0 %v198, 111
      %v398 = vpop.permute.xlu0 %397
      %399 = vrot.lane.b32.xlu0 %v200, 111
      %v400 = vpop.permute.xlu0 %399
      %vm401 = vcmp.lt.s32.totalorder %v207, 111
      %v402 = vsel %vm401, %v398, %v400
      %v403 = vsel %vm401, %v400, %v398
      %s404 = scalar_lea.vmem %s3, 16
      %v405 = vld [vmem:[%s404] ss:$8 sm:$0x3]
      %v407 = vlaneseq
      %v408 = vshrl.u32 %v407, 7
      %v409 = vsub.s32 0, %v408
      %v410 = vrot.slane %v405, %v409
      %v411 = vlaneseq
      %v412 = vshrl.u32 %v411, 7
      %v413 = vsub.s32 1, %v412
      %v414 = vrot.slane %v405, %v413
      %v417 = vmul.f32 %v402, %v410
      %v418 = vmul.f32 %v403, %v414
      %419 = vst [vmem:[#allocation2 + $0x40] sm:$0xf] %v417
      %420 = vst [vmem:[#allocation2 + $0x48] sm:$0xf] %v418
      %v421 = vld [vmem:[%s1] sm:$0xf]
      %v422 = vld [vmem:[#allocation2] sm:$0xff]
      %v423 = vld [vmem:[#allocation2 + $0x8] sm:$0xff]
      %v424 = vld [vmem:[#allocation2 + $0x10] sm:$0xff]
      %v425 = vld [vmem:[#allocation2 + $0x18] sm:$0xff]
      %v426 = vld [vmem:[#allocation2 + $0x20] sm:$0xff]
      %v427 = vld [vmem:[#allocation2 + $0x28] sm:$0xff]
      %v428 = vld [vmem:[#allocation2 + $0x30] sm:$0xff]
      %v429 = vld [vmem:[#allocation2 + $0x38] sm:$0xff]
      %v430 = vld [vmem:[#allocation2 + $0x40] sm:$0xf]
      %v431 = vld [vmem:[#allocation2 + $0x48] sm:$0xf]
      %v432 = vld [vmem:[%s2] sm:$0xf]
      %434 = vset.pattern.permute.xlu0 0
      %435 = vperm.xlu0 %434, %v432
      %v436 = vpop.permute.xlu0 %435
      %vm438 = vcmask 293888
      %v440 = vsel %vm438, %v421, 0
      %vm442 = vcmask 1043456
      %v444 = vsel %vm442, %v430, 0
      %v447 = vsel %vm442, %v431, 0
      %449 = vmatprep.subr.mxu0 %v423
      %450 = vmatpush1.msra.mxu0 %v422
      %451 = vmatprep.subr.mxu0 %v425
      %452 = vmatpush1.msra.mxu0 %v424
      %453 = vmatprep.subr.mxu0 %v427
      %454 = vmatpush1.msra.mxu0 %v426
      %455 = vmatprep.subr.mxu0 %v429
      %456 = vmatpush1.msra.mxu0 %v428
      %457 = vmatprep.subr.mxu0 %v447
      %458 = vmatpush1.msra.mxu0 %v444
      %459 = vmatprep.subr.mxu0 0.0
      %460 = vmatpush1.msra.mxu0 0.0
      %461 = vmatprep.subr.mxu0 0.0
      %462 = vmatpush1.msra.mxu0 0.0
      %463 = vmatprep.subr.mxu0 0.0
      %464 = vmatpush1.msra.mxu0 0.0
      %465 = vmatprep.subr.mxu0 0.0
      %466 = vmatpush1.msra.mxu0 0.0
      %467 = vmatprep.subr.mxu0 0.0
      %468 = vmatpush1.msra.mxu0 0.0
      %469 = vmatprep.subr.mxu0 0.0
      %470 = vmatpush1.msra.mxu0 0.0
      %471 = vmatprep.subr.mxu0 0.0
      %472 = vmatpush1.msra.mxu0 0.0
      %473 = vmatprep.subr.mxu0 0.0
      %474 = vmatpush1.msra.mxu0 0.0
      %475 = vmatprep.subr.mxu0 0.0
      %476 = vmatpush1.msra.mxu0 0.0
      %477 = vmatprep.subr.mxu0 0.0
      %478 = vmatpush1.msra.mxu0 0.0
      %479 = vmatprep.subr.mxu0 0.0
      %480 = vmatpush1.msra.mxu0 0.0
      %481 = vmatprep.subr.mxu0 0.0
      %482 = vmatpush1.msra.mxu0 0.0
      %483 = vmatprep.subr.mxu0 0.0
      %484 = vmatpush1.msra.mxu0 0.0
      %485 = vmatprep.subr.mxu0 0.0
      %486 = vmatpush1.msra.mxu0 0.0
      %487 = vmatprep.subr.mxu0 0.0
      %488 = vmatpush1.msra.mxu0 0.0
      %489 = vmatprep.subr.mxu0 0.0
      %490 = vmatpush1.msra.mxu0 0.0
      %491 = vmatprep.subr.mxu0 0.0
      %492 = vmatpush1.msra.mxu0 0.0
      %493 = vmatprep.subr.mxu0 0.0
      %494 = vmatpush1.msra.mxu0 0.0
      %495 = vmatprep.subr.mxu0 0.0
      %496 = vmatpush1.msra.mxu0 0.0
      %497 = vmatprep.subr.mxu0 0.0
      %498 = vmatpush1.msra.mxu0 0.0
      %499 = vmatprep.subr.mxu0 0.0
      %500 = vmatpush1.msra.mxu0 0.0
      %501 = vmatprep.subr.mxu0 0.0
      %502 = vmatpush1.msra.mxu0 0.0
      %503 = vmatprep.subr.mxu0 0.0
      %504 = vmatpush1.msra.mxu0 0.0
      %505 = vmatprep.subr.mxu0 0.0
      %506 = vmatpush1.msra.mxu0 0.0
      %507 = vmatprep.subr.mxu0 0.0
      %508 = vmatpush1.msra.mxu0 0.0
      %509 = vmatprep.subr.mxu0 0.0
      %510 = vmatpush1.msra.mxu0 0.0
      %511 = vmatprep.subr.mxu0 0.0
      %512 = vmatpush1.msra.mxu0 0.0
      %513 = vmatprep.mubr.f32.mxu0 0.0
      %514 = vmatmul.mubr.f32.gmra.mrb[0].mxu0 %v440
      %v515 = vpop.f32.mrb[0].mxu0
      %v516 = vadd.f32 %v436, %v515
      %v517 = vpop.f32.mrb[0].mxu0
      %v518 = vadd.f32 %v436, %v517
      %519 = vdwg.mxu0
      %v522 = vcombine.low %v516, %v518
      %524 = vst [vmem:[%s197] sm:$0xff] %v522
      %p525 = scmp.lt.s32.totalorder %s15, 1
      %s526 = scalar_select %p525, %s15, 1
      %s527 = smul.addr %s526, 2
      %s528 = smul.addr %s527, 4
      %s529 = scalar_lea.vmem %s4, %s528
      // Predicated region
      $region37: #{resnet_block_forward.3} parent=35 // pred_check
        %p530 = pneg %p122
      $region38: #{resnet_block_forward.3} parent=35 // pred_check_branch
        %532 = sbr.rel (%p530) target = $region40
      $region39: #{resnet_block_forward.3} parent=35 // pred_region
        _
      $region40: #{resnet_block_forward.3} parent=35 // pred_fallthru
        _
    $region36: #{resnet_block_forward.3} parent=5 // pred_fallthru
      _
    %p533 = scmp.le.s32.totalorder 2, %s10
    // Predicated region
    $region41: #{resnet_block_forward.3} parent=5 // pred_check
      %p534 = pneg %p533
    $region42: #{resnet_block_forward.3} parent=5 // pred_check_branch
      %536 = sbr.rel (%p534) target = $region44
    $region43: #{resnet_block_forward.3} parent=5 // pred_region
      %s537 = ssub.s32 %s10, 2
      // Predicated region
      $region45: #{resnet_block_forward.3} parent=43 // pred_check
        %p538 = pneg %p128
      $region46: #{resnet_block_forward.3} parent=43 // pred_check_branch
        %540 = sbr.rel (%p538) target = $region48
      $region47: #{resnet_block_forward.3} parent=43 // pred_region
        %p541 = scmp.lt.s32.totalorder %s16, 1
        %s542 = scalar_select %p541, %s16, 1
        %s543 = smul.addr %s542, 2
        %s544 = smul.addr %s543, 4
        %s545 = scalar_lea.vmem %s4, %s544
      $region48: #{resnet_block_forward.3} parent=43 // pred_fallthru
        _
    $region44: #{resnet_block_forward.3} parent=5 // pred_fallthru
      _
  $region6: #{resnet_block_forward.3} parent=0 // loop_footer
    %s14 = sadd.s32 1, %s10
  $region7: #{resnet_block_forward.3} parent=0 // loop_footer_branch
    %9 = sbr.rel target = $region3
  $region8: #{resnet_block_forward.3} parent=0 // loop_exit
    _

// kernel: resnet_block_forward.4
$region0: #{resnet_block_forward.4}
  #allocation0 [shape = 'u32[]', space=smem, size = 0x4, offset = 0x4, fixed_abs, tag = 'smem constant byte address 0x4 - core index']
  #allocation1 [shape = 'u32[144,128]{1,0:T(1,128)}', space=vmem, size = 0x12000, scoped, tag = 'internal scratch']
  #allocation2 [shape = 'f32[36,256]{1,0:T(8,128)}', space=vmem, size = 0xa000, scoped, tag = 'scratch operand']
  #allocation3 [shape = 'f32[1,1]{1,0:T(1,128)S(6)}', space=smem, size = 0x200, scoped, tag = 'scoped memory for resnet_block_forward.4']
  %s0 = inlined_call_operand.vmem [shape: f32[2,4,256], index: 0, kind: input, shape index: {}]
  %s1 = inlined_call_operand.vmem [shape: f32[4,1], index: 1, kind: input, shape index: {}]
  %s2 = inlined_call_operand.vmem [shape: f32[4,1], index: 2, kind: input, shape index: {}]
  %s3 = inlined_call_operand.vmem [shape: f32[4,36], index: 3, kind: input, shape index: {}]
  %s4 = inlined_call_operand.vmem [shape: f32[4,1], index: 4, kind: input, shape index: {}]
  %s5 = inlined_call_operand.vmem [shape: f32[9,256], index: 5, kind: input, shape index: {}]
  %s6 = inlined_call_operand.<no memory space> [shape: f32[1,1], index: 6, kind: input, shape index: {}]
  %s7 = inlined_call_operand.vmem [shape: f32[2,4,256], index: 7, kind: output, shape index: {}]
  %s8 = sld [smem:[#allocation0]]
  $region61: #{resnet_block_forward.4} parent=0
    _
  %s10 = ssub.s32 1, %s8
  %s11 = scalar_select 0, %s10, %s8
  %12 = sst [smem:[#allocation3]] %s6
  loop: start=0, step=1, limit=4
  $region2: #{resnet_block_forward.4} parent=0 // loop_pre_header
    _
  $region3: #{resnet_block_forward.4} parent=0 // loop_header
    %s14 = sphi 0, %s18
    %p15 = scmp.ge.s32.totalorder %s14, 4
    %s24 = sphi 0, %s26
    %s27 = sphi 0, %s24
    %s28 = sphi 0, %s27
    %s44 = sphi 0, %s28
    %s48 = sphi 0, %s48
    %s50 = sphi 0, %s48
    %s51 = sphi 0, %s50
    %s65 = sphi 0, %s51
    %s69 = sphi 0, %s69
    %s71 = sphi 0, %s69
    %s72 = sphi 0, %s71
    %s86 = sphi 0, %s72
    %s90 = sphi 0, %s90
    %s92 = sphi 0, %s90
    %s93 = sphi 0, %s92
    %s107 = sphi 0, %s93
    %s111 = sphi 0, %s111
    %s113 = sphi 0, %s111
    %s114 = sphi 0, %s113
    %s128 = sphi 0, %s114
    %s132 = sphi 0, %s132
    %s134 = sphi 0, %s132
    %s135 = sphi 0, %s134
    %s149 = sphi 0, %s135
    %s153 = sphi 0, %s153
    %s155 = sphi 0, %s153
    %s156 = sphi 0, %s155
    %s170 = sphi 0, %s156
    %s176 = sphi 0, %s178
    %s179 = sphi 0, %s176
    %s180 = sphi 0, %s179
    %s196 = sphi 0, %s180
  $region4: #{resnet_block_forward.4} parent=0 // loop_header_branch
    %17 = sbr.rel (%p15) target = $region8
  $region5: #{resnet_block_forward.4} parent=0 // loop_body
    %s19 = ssub.s32 %s14, 1
    %s20 = ssub.s32 %s14, 2
    %s21 = sadd.s32 %s14, 1
    %s22 = ssub.s32 %s14, %s21
    %p23 = scmp.eq.s32.totalorder %s22, 0
    %s25 = sadd.s32 %s24, 1
    %s26 = scalar_select %p23, %s24, %s25
    %p29 = pneg %p23
    %p30 = scmp.eq.s32.totalorder %s14, 1
    %p31 = por %p29, %p30
    %p32 = scmp.ne.s32.totalorder %s24, %s27
    %p33 = scmp.eq.s32.totalorder %s14, 0
    %p34 = por %p32, %p33
    %p35 = scmp.ne.s32.totalorder %s24, %s27
    %p36 = scmp.eq.s32.totalorder %s19, 1
    %p37 = por %p35, %p36
    %p38 = scmp.ne.s32.totalorder %s27, %s28
    %p39 = scmp.eq.s32.totalorder %s19, 0
    %p40 = por %p38, %p39
    %p41 = scmp.ne.s32.totalorder %s27, %s28
    %p42 = scmp.eq.s32.totalorder %s20, 1
    %p43 = por %p41, %p42
    %p45 = scmp.ne.s32.totalorder %s28, %s44
    %p46 = scmp.eq.s32.totalorder %s20, 0
    %p47 = por %p45, %p46
    %s49 = sadd.s32 %s48, 1
    %p52 = scmp.eq.s32.totalorder %s14, 1
    %p53 = scmp.ne.s32.totalorder %s48, %s50
    %p54 = scmp.eq.s32.totalorder %s14, 0
    %p55 = por %p53, %p54
    %p56 = scmp.ne.s32.totalorder %s48, %s50
    %p57 = scmp.eq.s32.totalorder %s19, 1
    %p58 = por %p56, %p57
    %p59 = scmp.ne.s32.totalorder %s50, %s51
    %p60 = scmp.eq.s32.totalorder %s19, 0
    %p61 = por %p59, %p60
    %p62 = scmp.ne.s32.totalorder %s50, %s51
    %p63 = scmp.eq.s32.totalorder %s20, 1
    %p64 = por %p62, %p63
    %p66 = scmp.ne.s32.totalorder %s51, %s65
    %p67 = scmp.eq.s32.totalorder %s20, 0
    %p68 = por %p66, %p67
    %s70 = sadd.s32 %s69, 1
    %p73 = scmp.eq.s32.totalorder %s14, 1
    %p74 = scmp.ne.s32.totalorder %s69, %s71
    %p75 = scmp.eq.s32.totalorder %s14, 0
    %p76 = por %p74, %p75
    %p77 = scmp.ne.s32.totalorder %s69, %s71
    %p78 = scmp.eq.s32.totalorder %s19, 1
    %p79 = por %p77, %p78
    %p80 = scmp.ne.s32.totalorder %s71, %s72
    %p81 = scmp.eq.s32.totalorder %s19, 0
    %p82 = por %p80, %p81
    %p83 = scmp.ne.s32.totalorder %s71, %s72
    %p84 = scmp.eq.s32.totalorder %s20, 1
    %p85 = por %p83, %p84
    %p87 = scmp.ne.s32.totalorder %s72, %s86
    %p88 = scmp.eq.s32.totalorder %s20, 0
    %p89 = por %p87, %p88
    %s91 = sadd.s32 %s90, 1
    %p94 = scmp.eq.s32.totalorder %s14, 1
    %p95 = scmp.ne.s32.totalorder %s90, %s92
    %p96 = scmp.eq.s32.totalorder %s14, 0
    %p97 = por %p95, %p96
    %p98 = scmp.ne.s32.totalorder %s90, %s92
    %p99 = scmp.eq.s32.totalorder %s19, 1
    %p100 = por %p98, %p99
    %p101 = scmp.ne.s32.totalorder %s92, %s93
    %p102 = scmp.eq.s32.totalorder %s19, 0
    %p103 = por %p101, %p102
    %p104 = scmp.ne.s32.totalorder %s92, %s93
    %p105 = scmp.eq.s32.totalorder %s20, 1
    %p106 = por %p104, %p105
    %p108 = scmp.ne.s32.totalorder %s93, %s107
    %p109 = scmp.eq.s32.totalorder %s20, 0
    %p110 = por %p108, %p109
    %s112 = sadd.s32 %s111, 1
    %p115 = scmp.eq.s32.totalorder %s14, 1
    %p116 = scmp.ne.s32.totalorder %s111, %s113
    %p117 = scmp.eq.s32.totalorder %s14, 0
    %p118 = por %p116, %p117
    %p119 = scmp.ne.s32.totalorder %s111, %s113
    %p120 = scmp.eq.s32.totalorder %s19, 1
    %p121 = por %p119, %p120
    %p122 = scmp.ne.s32.totalorder %s113, %s114
    %p123 = scmp.eq.s32.totalorder %s19, 0
    %p124 = por %p122, %p123
    %p125 = scmp.ne.s32.totalorder %s113, %s114
    %p126 = scmp.eq.s32.totalorder %s20, 1
    %p127 = por %p125, %p126
    %p129 = scmp.ne.s32.totalorder %s114, %s128
    %p130 = scmp.eq.s32.totalorder %s20, 0
    %p131 = por %p129, %p130
    %s133 = sadd.s32 %s132, 1
    %p136 = scmp.eq.s32.totalorder %s14, 1
    %p137 = scmp.ne.s32.totalorder %s132, %s134
    %p138 = scmp.eq.s32.totalorder %s14, 0
    %p139 = por %p137, %p138
    %p140 = scmp.ne.s32.totalorder %s132, %s134
    %p141 = scmp.eq.s32.totalorder %s19, 1
    %p142 = por %p140, %p141
    %p143 = scmp.ne.s32.totalorder %s134, %s135
    %p144 = scmp.eq.s32.totalorder %s19, 0
    %p145 = por %p143, %p144
    %p146 = scmp.ne.s32.totalorder %s134, %s135
    %p147 = scmp.eq.s32.totalorder %s20, 1
    %p148 = por %p146, %p147
    %p150 = scmp.ne.s32.totalorder %s135, %s149
    %p151 = scmp.eq.s32.totalorder %s20, 0
    %p152 = por %p150, %p151
    %s154 = sadd.s32 %s153, 1
    %p157 = scmp.eq.s32.totalorder %s14, 1
    %p158 = scmp.ne.s32.totalorder %s153, %s155
    %p159 = scmp.eq.s32.totalorder %s14, 0
    %p160 = por %p158, %p159
    %p161 = scmp.ne.s32.totalorder %s153, %s155
    %p162 = scmp.eq.s32.totalorder %s19, 1
    %p163 = por %p161, %p162
    %p164 = scmp.ne.s32.totalorder %s155, %s156
    %p165 = scmp.eq.s32.totalorder %s19, 0
    %p166 = por %p164, %p165
    %p167 = scmp.ne.s32.totalorder %s155, %s156
    %p168 = scmp.eq.s32.totalorder %s20, 1
    %p169 = por %p167, %p168
    %p171 = scmp.ne.s32.totalorder %s156, %s170
    %p172 = scmp.eq.s32.totalorder %s20, 0
    %p173 = por %p171, %p172
    %s174 = ssub.s32 %s14, %s21
    %p175 = scmp.eq.s32.totalorder %s174, 0
    %s177 = sadd.s32 %s176, 1
    %s178 = scalar_select %p175, %s176, %s177
    %p181 = pneg %p175
    %p182 = scmp.eq.s32.totalorder %s14, 1
    %p183 = por %p181, %p182
    %p184 = scmp.ne.s32.totalorder %s176, %s179
    %p185 = scmp.eq.s32.totalorder %s14, 0
    %p186 = por %p184, %p185
    %p187 = scmp.ne.s32.totalorder %s176, %s179
    %p188 = scmp.eq.s32.totalorder %s19, 1
    %p189 = por %p187, %p188
    %p190 = scmp.ne.s32.totalorder %s179, %s180
    %p191 = scmp.eq.s32.totalorder %s19, 0
    %p192 = por %p190, %p191
    %p193 = scmp.ne.s32.totalorder %s179, %s180
    %p194 = scmp.eq.s32.totalorder %s20, 1
    %p195 = por %p193, %p194
    %p197 = scmp.ne.s32.totalorder %s180, %s196
    %p198 = scmp.eq.s32.totalorder %s20, 0
    %p199 = por %p197, %p198
    %p200 = scmp.le.s32.totalorder 1, %s14
    %p201 = scmp.lt.s32.totalorder %s14, 3
    %p202 = pnand %p200, %p201
    %p203 = pneg %p202
    // Predicated region
    $region9: #{resnet_block_forward.4} parent=5 // pred_check
      _
    $region10: #{resnet_block_forward.4} parent=5 // pred_check_branch
      %205 = sbr.rel (%p202) target = $region12
    $region11: #{resnet_block_forward.4} parent=5 // pred_region
      %s206 = ssub.s32 %s14, 1
      // Predicated region
      $region13: #{resnet_block_forward.4} parent=11 // pred_check
        %p207 = pneg %p61
      $region14: #{resnet_block_forward.4} parent=11 // pred_check_branch
        %209 = sbr.rel (%p207) target = $region16
      $region15: #{resnet_block_forward.4} parent=11 // pred_region
        _
      $region16: #{resnet_block_forward.4} parent=11 // pred_fallthru
        _
      // Predicated region
      $region17: #{resnet_block_forward.4} parent=11 // pred_check
        %p210 = pneg %p82
      $region18: #{resnet_block_forward.4} parent=11 // pred_check_branch
        %212 = sbr.rel (%p210) target = $region20
      $region19: #{resnet_block_forward.4} parent=11 // pred_region
        _
      $region20: #{resnet_block_forward.4} parent=11 // pred_fallthru
        _
      // Predicated region
      $region21: #{resnet_block_forward.4} parent=11 // pred_check
        %p213 = pneg %p103
      $region22: #{resnet_block_forward.4} parent=11 // pred_check_branch
        %215 = sbr.rel (%p213) target = $region24
      $region23: #{resnet_block_forward.4} parent=11 // pred_region
        _
      $region24: #{resnet_block_forward.4} parent=11 // pred_fallthru
        _
      // Predicated region
      $region25: #{resnet_block_forward.4} parent=11 // pred_check
        %p216 = pneg %p124
      $region26: #{resnet_block_forward.4} parent=11 // pred_check_branch
        %218 = sbr.rel (%p216) target = $region28
      $region27: #{resnet_block_forward.4} parent=11 // pred_region
        _
      $region28: #{resnet_block_forward.4} parent=11 // pred_fallthru
        _
      // Predicated region
      $region29: #{resnet_block_forward.4} parent=11 // pred_check
        %p219 = pneg %p145
      $region30: #{resnet_block_forward.4} parent=11 // pred_check_branch
        %221 = sbr.rel (%p219) target = $region32
      $region31: #{resnet_block_forward.4} parent=11 // pred_region
        _
      $region32: #{resnet_block_forward.4} parent=11 // pred_fallthru
        _
      // Predicated region
      $region33: #{resnet_block_forward.4} parent=11 // pred_check
        %p222 = pneg %p166
      $region34: #{resnet_block_forward.4} parent=11 // pred_check_branch
        %224 = sbr.rel (%p222) target = $region36
      $region35: #{resnet_block_forward.4} parent=11 // pred_region
        _
      $region36: #{resnet_block_forward.4} parent=11 // pred_fallthru
        _
    $region12: #{resnet_block_forward.4} parent=5 // pred_fallthru
      _
    %p225 = scmp.lt.s32.totalorder %s14, 2
    // Predicated region
    $region37: #{resnet_block_forward.4} parent=5 // pred_check
      %p226 = pneg %p225
    $region38: #{resnet_block_forward.4} parent=5 // pred_check_branch
      %228 = sbr.rel (%p226) target = $region40
    $region39: #{resnet_block_forward.4} parent=5 // pred_region
      // Predicated region
      $region41: #{resnet_block_forward.4} parent=39 // pred_check
        %p229 = pneg %p34
      $region42: #{resnet_block_forward.4} parent=39 // pred_check_branch
        %231 = sbr.rel (%p229) target = $region44
      $region43: #{resnet_block_forward.4} parent=39 // pred_region
        %p232 = scmp.lt.s32.totalorder %s14, 1
        %s233 = scalar_select %p232, %s14, 1
        %s234 = smul.addr %s233, 2
        %s235 = smul.addr %s234, 4
        %s236 = scalar_lea.vmem %s0, %s235
      $region44: #{resnet_block_forward.4} parent=39 // pred_fallthru
        _
    $region40: #{resnet_block_forward.4} parent=5 // pred_fallthru
      _
    %p237 = scmp.le.s32.totalorder 1, %s14
    %p238 = scmp.lt.s32.totalorder %s14, 3
    %p239 = pnand %p237, %p238
    %p240 = pneg %p239
    // Predicated region
    $region45: #{resnet_block_forward.4} parent=5 // pred_check
      _
    $region46: #{resnet_block_forward.4} parent=5 // pred_check_branch
      %242 = sbr.rel (%p239) target = $region48
    $region47: #{resnet_block_forward.4} parent=5 // pred_region
      %s243 = ssub.s32 %s14, 1
      %p244 = scmp.lt.s32.totalorder %s19, 1
      %s245 = scalar_select %p244, %s19, 1
      %s246 = smul.addr %s245, 2
      %s247 = smul.addr %s246, 4
      %s248 = scalar_lea.vmem %s0, %s247
      %p249 = pneg %p40
      %p250 = pneg %p37
      %p251 = pneg %p61
      %p252 = pneg %p58
      %p253 = pneg %p82
      %p254 = pneg %p79
      %p255 = pneg %p103
      %p256 = pneg %p100
      %p257 = pneg %p124
      %p258 = pneg %p121
      %p259 = pneg %p145
      %p260 = pneg %p142
      %p261 = pneg %p166
      %p262 = pneg %p163
      %p263 = pneg %p192
      %p264 = pneg %p189
      %p265 = scmp.lt.s32.totalorder %s19, 1
      %s266 = scalar_select %p265, %s19, 1
      %s267 = smul.addr %s266, 2
      %s268 = smul.addr %s267, 4
      %s269 = scalar_lea.vmem %s7, %s268
      %p270 = scmp.lt.s32.totalorder %s19, 1
      %s271 = scalar_select %p270, %s19, 1
      %s272 = smul.addr %s271, 2
      %s273 = smul.addr %s272, 4
      %s274 = scalar_lea.vmem %s0, %s273
      %p275 = scmp.lt.s32.totalorder %s19, 1
      %s276 = scalar_select %p275, %s19, 1
      %s277 = smul.addr %s276, 2
      %s278 = smul.addr %s277, 4
      %s279 = scalar_lea.vmem %s7, %s278
      %s280 = sld [smem:[#allocation3]]
      %v281 = vld [vmem:[%s274] sm:$0xff]
      %v282 = vld [vmem:[%s1] sm:$0xf]
      %284 = vset.pattern.permute.xlu0 0
      %285 = vperm.xlu0 %284, %v282
      %v286 = vpop.permute.xlu0 %285
      %v288 = vunpack.c.l.s4 839922192
      %v289 = vunpack.c.0.s8 %v288
      %v290 = vlaneseq
      %v291 = vshrl.u32 %v290, 7
      %v292 = vsub.s32 %v289, %v291
      %v293 = vrot.slane %v286, %v292
      %v295 = vmul.f32 %v281, %v293
      %v296 = vld [vmem:[%s2] sm:$0xf]
      %298 = vset.pattern.permute.xlu0 0
      %299 = vperm.xlu0 %298, %v296
      %v300 = vpop.permute.xlu0 %299
      %v302 = vunpack.c.l.s4 839922192
      %v303 = vunpack.c.0.s8 %v302
      %v304 = vlaneseq
      %v305 = vshrl.u32 %v304, 7
      %v306 = vsub.s32 %v303, %v305
      %v307 = vrot.slane %v300, %v306
      %v309 = vadd.f32 %v295, %v307
      %vm310 = vcmp.ge.f32.partialorder %v309, 0.0
      %v311 = vstv %s280
      %v312 = vmul.f32 %v311, %v309
      %v313 = vsel %vm310, %v309, %v312
      %v315 = vcombine.high %v313, %v313
      %317 = vrot.lane.b32.xlu0 %v313, 17
      %v318 = vpop.permute.xlu0 %317
      %319 = vrot.lane.b32.xlu0 %v315, 17
      %v320 = vpop.permute.xlu0 %319
      %v321 = vlaneseq
      %v322 = vand.u32 %v321, 127
      %vm323 = vcmp.lt.s32.totalorder %v322, 17
      %v324 = vsel %vm323, %v318, %v320
      %v325 = vsel %vm323, %v320, %v318
      %v326 = vld [vmem:[%s5] ss:$8 sm:$0x3]
      %v328 = vlaneseq
      %v329 = vshrl.u32 %v328, 7
      %v330 = vsub.s32 0, %v329
      %v331 = vrot.slane %v326, %v330
      %v332 = vlaneseq
      %v333 = vshrl.u32 %v332, 7
      %v334 = vsub.s32 1, %v333
      %v335 = vrot.slane %v326, %v334
      %v338 = vmul.f32 %v325, %v331
      %v339 = vmul.f32 %v324, %v335
      %340 = vst [vmem:[#allocation2] sm:$0xf] %v338
      %341 = vst [vmem:[#allocation2 + $0x8] sm:$0xf] %v339
      %342 = vrot.lane.b32.xlu0 %v313, 16
      %v343 = vpop.permute.xlu0 %342
      %344 = vrot.lane.b32.xlu0 %v315, 16
      %v345 = vpop.permute.xlu0 %344
      %vm346 = vcmp.lt.s32.totalorder %v322, 16
      %v347 = vsel %vm346, %v343, %v345
      %v348 = vsel %vm346, %v345, %v343
      %s349 = scalar_lea.vmem %s5, 1
      %v350 = vld [vmem:[%s349] ss:$8 sm:$0x3]
      %v352 = vlaneseq
      %v353 = vshrl.u32 %v352, 7
      %v354 = vsub.s32 0, %v353
      %v355 = vrot.slane %v350, %v354
      %v356 = vlaneseq
      %v357 = vshrl.u32 %v356, 7
      %v358 = vsub.s32 1, %v357
      %v359 = vrot.slane %v350, %v358
      %v362 = vmul.f32 %v348, %v355
      %v363 = vmul.f32 %v347, %v359
      %v366 = vrot.slane %v362, 4
      %v367 = vrot.slane %v363, 4
      %370 = vst [vmem:[#allocation2] sm:$0xf0] %v366
      %371 = vst [vmem:[#allocation2 + $0x8] sm:$0xf0] %v367
      %372 = vrot.lane.b32.xlu0 %v313, 15
      %v373 = vpop.permute.xlu0 %372
      %374 = vrot.lane.b32.xlu0 %v315, 15
      %v375 = vpop.permute.xlu0 %374
      %vm376 = vcmp.lt.s32.totalorder %v322, 15
      %v377 = vsel %vm376, %v373, %v375
      %v378 = vsel %vm376, %v375, %v373
      %s379 = scalar_lea.vmem %s5, 2
      %v380 = vld [vmem:[%s379] ss:$8 sm:$0x3]
      %v382 = vlaneseq
      %v383 = vshrl.u32 %v382, 7
      %v384 = vsub.s32 0, %v383
      %v385 = vrot.slane %v380, %v384
      %v386 = vlaneseq
      %v387 = vshrl.u32 %v386, 7
      %v388 = vsub.s32 1, %v387
      %v389 = vrot.slane %v380, %v388
      %v392 = vmul.f32 %v378, %v385
      %v393 = vmul.f32 %v377, %v389
      %394 = vst [vmem:[#allocation2 + $0x10] sm:$0xf] %v392
      %395 = vst [vmem:[#allocation2 + $0x18] sm:$0xf] %v393
      %396 = vrot.lane.b32.xlu0 %v313, 1
      %v397 = vpop.permute.xlu0 %396
      %398 = vrot.lane.b32.xlu0 %v315, 1
      %v399 = vpop.permute.xlu0 %398
      %vm400 = vcmp.lt.s32.totalorder %v322, 1
      %v401 = vsel %vm400, %v397, %v399
      %v402 = vsel %vm400, %v399, %v397
      %s403 = scalar_lea.vmem %s5, 3
      %v404 = vld [vmem:[%s403] ss:$8 sm:$0x3]
      %v406 = vlaneseq
      %v407 = vshrl.u32 %v406, 7
      %v408 = vsub.s32 0, %v407
      %v409 = vrot.slane %v404, %v408
      %v410 = vlaneseq
      %v411 = vshrl.u32 %v410, 7
      %v412 = vsub.s32 1, %v411
      %v413 = vrot.slane %v404, %v412
      %v416 = vmul.f32 %v402, %v409
      %v417 = vmul.f32 %v401, %v413
      %v420 = vrot.slane %v416, 4
      %v421 = vrot.slane %v417, 4
      %424 = vst [vmem:[#allocation2 + $0x10] sm:$0xf0] %v420
      %425 = vst [vmem:[#allocation2 + $0x18] sm:$0xf0] %v421
      %426 = vst [vmem:[#allocation2 + $0x20] sm:$0xf] %v313
      %427 = vst [vmem:[#allocation2 + $0x28] sm:$0xf] %v315
      %428 = vrot.lane.b32.xlu0 %v313, 127
      %v429 = vpop.permute.xlu0 %428
      %430 = vrot.lane.b32.xlu0 %v315, 127
      %v431 = vpop.permute.xlu0 %430
      %vm432 = vcmp.lt.s32.totalorder %v322, 127
      %v433 = vsel %vm432, %v429, %v431
      %v434 = vsel %vm432, %v431, %v429
      %s435 = scalar_lea.vmem %s5, 5
      %v436 = vld [vmem:[%s435] ss:$8 sm:$0x3]
      %v438 = vlaneseq
      %v439 = vshrl.u32 %v438, 7
      %v440 = vsub.s32 0, %v439
      %v441 = vrot.slane %v436, %v440
      %v442 = vlaneseq
      %v443 = vshrl.u32 %v442, 7
      %v444 = vsub.s32 1, %v443
      %v445 = vrot.slane %v436, %v444
      %v448 = vmul.f32 %v433, %v441
      %v449 = vmul.f32 %v434, %v445
      %v452 = vrot.slane %v448, 4
      %v453 = vrot.slane %v449, 4
      %456 = vst [vmem:[#allocation2 + $0x20] sm:$0xf0] %v452
      %457 = vst [vmem:[#allocation2 + $0x28] sm:$0xf0] %v453
      %458 = vrot.lane.b32.xlu0 %v313, 113
      %v459 = vpop.permute.xlu0 %458
      %460 = vrot.lane.b32.xlu0 %v315, 113
      %v461 = vpop.permute.xlu0 %460
      %vm462 = vcmp.lt.s32.totalorder %v322, 113
      %v463 = vsel %vm462, %v459, %v461
      %v464 = vsel %vm462, %v461, %v459
      %s465 = scalar_lea.vmem %s5, 6
      %v466 = vld [vmem:[%s465] ss:$8 sm:$0x3]
      %v468 = vlaneseq
      %v469 = vshrl.u32 %v468, 7
      %v470 = vsub.s32 0, %v469
      %v471 = vrot.slane %v466, %v470
      %v472 = vlaneseq
      %v473 = vshrl.u32 %v472, 7
      %v474 = vsub.s32 1, %v473
      %v475 = vrot.slane %v466, %v474
      %v478 = vmul.f32 %v463, %v471
      %v479 = vmul.f32 %v464, %v475
      %480 = vst [vmem:[#allocation2 + $0x30] sm:$0xf] %v478
      %481 = vst [vmem:[#allocation2 + $0x38] sm:$0xf] %v479
      %482 = vrot.lane.b32.xlu0 %v313, 112
      %v483 = vpop.permute.xlu0 %482
      %484 = vrot.lane.b32.xlu0 %v315, 112
      %v485 = vpop.permute.xlu0 %484
      %vm486 = vcmp.lt.s32.totalorder %v322, 112
      %v487 = vsel %vm486, %v483, %v485
      %v488 = vsel %vm486, %v485, %v483
      %s489 = scalar_lea.vmem %s5, 7
      %v490 = vld [vmem:[%s489] ss:$8 sm:$0x3]
      %v492 = vlaneseq
      %v493 = vshrl.u32 %v492, 7
      %v494 = vsub.s32 0, %v493
      %v495 = vrot.slane %v490, %v494
      %v496 = vlaneseq
      %v497 = vshrl.u32 %v496, 7
      %v498 = vsub.s32 1, %v497
      %v499 = vrot.slane %v490, %v498
      %v502 = vmul.f32 %v487, %v495
      %v503 = vmul.f32 %v488, %v499
      %v506 = vrot.slane %v502, 4
      %v507 = vrot.slane %v503, 4
      %510 = vst [vmem:[#allocation2 + $0x30] sm:$0xf0] %v506
      %511 = vst [vmem:[#allocation2 + $0x38] sm:$0xf0] %v507
      %512 = vrot.lane.b32.xlu0 %v313, 111
      %v513 = vpop.permute.xlu0 %512
      %514 = vrot.lane.b32.xlu0 %v315, 111
      %v515 = vpop.permute.xlu0 %514
      %vm516 = vcmp.lt.s32.totalorder %v322, 111
      %v517 = vsel %vm516, %v513, %v515
      %v518 = vsel %vm516, %v515, %v513
      %s519 = scalar_lea.vmem %s5, 16
      %v520 = vld [vmem:[%s519] ss:$8 sm:$0x3]
      %v522 = vlaneseq
      %v523 = vshrl.u32 %v522, 7
      %v524 = vsub.s32 0, %v523
      %v525 = vrot.slane %v520, %v524
      %v526 = vlaneseq
      %v527 = vshrl.u32 %v526, 7
      %v528 = vsub.s32 1, %v527
      %v529 = vrot.slane %v520, %v528
      %v532 = vmul.f32 %v517, %v525
      %v533 = vmul.f32 %v518, %v529
      %534 = vst [vmem:[#allocation2 + $0x40] sm:$0xf] %v532
      %535 = vst [vmem:[#allocation2 + $0x48] sm:$0xf] %v533
      %v536 = vld [vmem:[%s3] sm:$0xf]
      %v537 = vld [vmem:[#allocation2] sm:$0xff]
      %v538 = vld [vmem:[#allocation2 + $0x8] sm:$0xff]
      %v539 = vld [vmem:[#allocation2 + $0x10] sm:$0xff]
      %v540 = vld [vmem:[#allocation2 + $0x18] sm:$0xff]
      %v541 = vld [vmem:[#allocation2 + $0x20] sm:$0xff]
      %v542 = vld [vmem:[#allocation2 + $0x28] sm:$0xff]
      %v543 = vld [vmem:[#allocation2 + $0x30] sm:$0xff]
      %v544 = vld [vmem:[#allocation2 + $0x38] sm:$0xff]
      %v545 = vld [vmem:[#allocation2 + $0x40] sm:$0xf]
      %v546 = vld [vmem:[#allocation2 + $0x48] sm:$0xf]
      %v547 = vld [vmem:[%s4] sm:$0xf]
      %549 = vset.pattern.permute.xlu0 0
      %550 = vperm.xlu0 %549, %v547
      %v551 = vpop.permute.xlu0 %550
      %vm553 = vcmask 293888
      %v555 = vsel %vm553, %v536, 0
      %vm557 = vcmask 1043456
      %v559 = vsel %vm557, %v545, 0
      %v562 = vsel %vm557, %v546, 0
      %564 = vmatprep.subr.mxu0 %v538
      %565 = vmatpush1.msra.mxu0 %v537
      %566 = vmatprep.subr.mxu0 %v540
      %567 = vmatpush1.msra.mxu0 %v539
      %568 = vmatprep.subr.mxu0 %v542
      %569 = vmatpush1.msra.mxu0 %v541
      %570 = vmatprep.subr.mxu0 %v544
      %571 = vmatpush1.msra.mxu0 %v543
      %572 = vmatprep.subr.mxu0 %v562
      %573 = vmatpush1.msra.mxu0 %v559
      %574 = vmatprep.subr.mxu0 0.0
      %575 = vmatpush1.msra.mxu0 0.0
      %576 = vmatprep.subr.mxu0 0.0
      %577 = vmatpush1.msra.mxu0 0.0
      %578 = vmatprep.subr.mxu0 0.0
      %579 = vmatpush1.msra.mxu0 0.0
      %580 = vmatprep.subr.mxu0 0.0
      %581 = vmatpush1.msra.mxu0 0.0
      %582 = vmatprep.subr.mxu0 0.0
      %583 = vmatpush1.msra.mxu0 0.0
      %584 = vmatprep.subr.mxu0 0.0
      %585 = vmatpush1.msra.mxu0 0.0
      %586 = vmatprep.subr.mxu0 0.0
      %587 = vmatpush1.msra.mxu0 0.0
      %588 = vmatprep.subr.mxu0 0.0
      %589 = vmatpush1.msra.mxu0 0.0
      %590 = vmatprep.subr.mxu0 0.0
      %591 = vmatpush1.msra.mxu0 0.0
      %592 = vmatprep.subr.mxu0 0.0
      %593 = vmatpush1.msra.mxu0 0.0
      %594 = vmatprep.subr.mxu0 0.0
      %595 = vmatpush1.msra.mxu0 0.0
      %596 = vmatprep.subr.mxu0 0.0
      %597 = vmatpush1.msra.mxu0 0.0
      %598 = vmatprep.subr.mxu0 0.0
      %599 = vmatpush1.msra.mxu0 0.0
      %600 = vmatprep.subr.mxu0 0.0
      %601 = vmatpush1.msra.mxu0 0.0
      %602 = vmatprep.subr.mxu0 0.0
      %603 = vmatpush1.msra.mxu0 0.0
      %604 = vmatprep.subr.mxu0 0.0
      %605 = vmatpush1.msra.mxu0 0.0
      %606 = vmatprep.subr.mxu0 0.0
      %607 = vmatpush1.msra.mxu0 0.0
      %608 = vmatprep.subr.mxu0 0.0
      %609 = vmatpush1.msra.mxu0 0.0
      %610 = vmatprep.subr.mxu0 0.0
      %611 = vmatpush1.msra.mxu0 0.0
      %612 = vmatprep.subr.mxu0 0.0
      %613 = vmatpush1.msra.mxu0 0.0
      %614 = vmatprep.subr.mxu0 0.0
      %615 = vmatpush1.msra.mxu0 0.0
      %616 = vmatprep.subr.mxu0 0.0
      %617 = vmatpush1.msra.mxu0 0.0
      %618 = vmatprep.subr.mxu0 0.0
      %619 = vmatpush1.msra.mxu0 0.0
      %620 = vmatprep.subr.mxu0 0.0
      %621 = vmatpush1.msra.mxu0 0.0
      %622 = vmatprep.subr.mxu0 0.0
      %623 = vmatpush1.msra.mxu0 0.0
      %624 = vmatprep.subr.mxu0 0.0
      %625 = vmatpush1.msra.mxu0 0.0
      %626 = vmatprep.subr.mxu0 0.0
      %627 = vmatpush1.msra.mxu0 0.0
      %628 = vmatprep.mubr.f32.mxu0 0.0
      %629 = vmatmul.mubr.f32.gmra.mrb[0].mxu0 %v555
      %v630 = vpop.f32.mrb[0].mxu0
      %v631 = vadd.f32 %v551, %v630
      %v632 = vpop.f32.mrb[0].mxu0
      %v633 = vadd.f32 %v551, %v632
      %634 = vdwg.mxu0
      %v637 = vcombine.low %v631, %v633
      %639 = vst [vmem:[%s279] sm:$0xff] %v637
      %p640 = scmp.lt.s32.totalorder %s19, 1
      %s641 = scalar_select %p640, %s19, 1
      %s642 = smul.addr %s641, 2
      %s643 = smul.addr %s642, 4
      %s644 = scalar_lea.vmem %s7, %s643
      // Predicated region
      $region49: #{resnet_block_forward.4} parent=47 // pred_check
        %p645 = pneg %p189
      $region50: #{resnet_block_forward.4} parent=47 // pred_check_branch
        %647 = sbr.rel (%p645) target = $region52
      $region51: #{resnet_block_forward.4} parent=47 // pred_region
        _
      $region52: #{resnet_block_forward.4} parent=47 // pred_fallthru
        _
    $region48: #{resnet_block_forward.4} parent=5 // pred_fallthru
      _
    %p648 = scmp.le.s32.totalorder 2, %s14
    // Predicated region
    $region53: #{resnet_block_forward.4} parent=5 // pred_check
      %p649 = pneg %p648
    $region54: #{resnet_block_forward.4} parent=5 // pred_check_branch
      %651 = sbr.rel (%p649) target = $region56
    $region55: #{resnet_block_forward.4} parent=5 // pred_region
      %s652 = ssub.s32 %s14, 2
      // Predicated region
      $region57: #{resnet_block_forward.4} parent=55 // pred_check
        %p653 = pneg %p195
      $region58: #{resnet_block_forward.4} parent=55 // pred_check_branch
        %655 = sbr.rel (%p653) target = $region60
      $region59: #{resnet_block_forward.4} parent=55 // pred_region
        %p656 = scmp.lt.s32.totalorder %s20, 1
        %s657 = scalar_select %p656, %s20, 1
        %s658 = smul.addr %s657, 2
        %s659 = smul.addr %s658, 4
        %s660 = scalar_lea.vmem %s7, %s659
      $region60: #{resnet_block_forward.4} parent=55 // pred_fallthru
        _
    $region56: #{resnet_block_forward.4} parent=5 // pred_fallthru
      _
  $region6: #{resnet_block_forward.4} parent=0 // loop_footer
    %s18 = sadd.s32 1, %s14
  $region7: #{resnet_block_forward.4} parent=0 // loop_footer_branch
    %13 = sbr.rel target = $region3
  $region8: #{resnet_block_forward.4} parent=0 // loop_exit
    _

</llo_original>
